<compile_context>
chip_gen: v5e
topology: v5e:2x2
jax: 0.10.0
libtpu: 0.0.40
codegen_flags: <defaults>
</compile_context>

<pallas_src>
import functools

import jax
import jax.numpy as jnp
from jax.experimental import pallas as pl
from jax.experimental.pallas import tpu as pltpu


# --------------------------- padding / tiling helpers --------------------------- #

_LANE = 128


def _round_up(v, m):
    return ((v + m - 1) // m) * m


def _node_tiling(num_nodes):
    """Padded node count and A_hat tile edge (a multiple of 128 that divides n_pad).

    128-wide tiles only reach ~30% of the HBM roofline (per-step overhead + short DMAs),
    so prefer 512/1024 tiles and accept up to ~3% extra padded rows to get them.
    """
    n_pad = _round_up(max(num_nodes, 1), _LANE)
    for t in (1024, 512, 256, 128):
        cand = _round_up(n_pad, t)
        if cand == n_pad or (t >= 256 and (cand - n_pad) * 33 <= n_pad):  # <=~3% extra rows
            return cand, t
    return n_pad, _LANE


def _vmem_limit_bytes():
    """Per-generation VMEM limit: physical capacity minus ~16 MiB compiler headroom.

    v5e/v6e: 128 MiB physical -> 112 MiB limit (well above the 16/32 MiB scoped defaults).
    v7x    :  64 MiB physical ->  48 MiB limit (asking for all 64 MiB leaves no headroom).
    """
    cap = 128 * 1024 * 1024
    try:
        cap = int(getattr(pltpu.get_tpu_info(), "vmem_capacity_bytes", cap))
    except Exception:
        pass
    return max(32 * 1024 * 1024, cap - 16 * 1024 * 1024)


# ------------------------------- Pallas kernels -------------------------------- #

def _pre_linear_kernel(x_ref, w_ref, b_ref, o32_ref, o16_ref):
    # h0 = x @ w + b   (bf16 MXU operands, f32 accumulation, f32 epilogue).
    h = jnp.dot(x_ref[...], w_ref[...], preferred_element_type=jnp.float32) + b_ref[...]
    o32_ref[...] = h                        # ori_x (f32)
    o16_ref[...] = h.astype(jnp.bfloat16)   # bf16 copy fed to the GCN chain


def _gcn_chain_kernel(h0_hbm, a_ref, w_ref, b_ref, out_ref,
                      h_buf, tmp_buf, acc_ref, h0_sem, *, tm, tk):
    """One fused pallas_call for ALL GCN layers.

    grid = (layer l, A row-tile i, A col-tile k); all axes 'arbitrary' (sequential)
    because h^l and h^l @ W_l live in VMEM scratch shared across grid steps.

      bootstrap  (l==i==k==0) : one-shot DMA  h^0 (HBM, bf16) -> h_buf        (not streamed!)
      phase (a)  (i == 0)     : tmp[k]   = h^l[k] @ W_l            (once per layer/k-tile)
      phase (b)  (every step) : acc[i]  += A_hat[i,k] @ tmp[k]     (f32 accumulator)
      finalize   (k == last)  : h^{l+1}[i] = relu(acc + b_l) -> h_buf (bf16);
                                out_ref[i] only written on the final layer.
    """
    l = pl.program_id(0)
    i = pl.program_id(1)
    k = pl.program_id(2)
    nl = pl.num_programs(0)
    nk = pl.num_programs(2)

    k0 = pl.multiple_of(k * tk, tk)

    # Bootstrap: copy the pre-processed features into the resident activation buffer once.
    @pl.when((l == 0) & (i == 0) & (k == 0))
    def _():
        cp = pltpu.make_async_copy(h0_hbm, h_buf, h0_sem)
        cp.start()
        cp.wait()

    # Phase (a): GCNConv's internal linear, computed once per (layer, k-tile).
    @pl.when(i == 0)
    def _():
        tmp_buf[pl.ds(k0, tk), :] = jnp.dot(
            h_buf[pl.ds(k0, tk), :], w_ref[0], preferred_element_type=jnp.float32
        ).astype(jnp.bfloat16)

    # Phase (b): normalized message passing, accumulated in f32.
    @pl.when(k == 0)
    def _():
        acc_ref[...] = jnp.zeros_like(acc_ref)

    acc_ref[...] += jnp.dot(
        a_ref[...], tmp_buf[pl.ds(k0, tk), :], preferred_element_type=jnp.float32
    )

    # Finalize row tile i of layer l: bias + ReLU in f32.
    @pl.when(k == nk - 1)
    def _():
        h_new = jnp.maximum(acc_ref[...] + b_ref[0], 0.0)
        i0 = pl.multiple_of(i * tm, tm)

        @pl.when(l < nl - 1)
        def _():
            h_buf[pl.ds(i0, tm), :] = h_new.astype(jnp.bfloat16)   # becomes h^{l+1}

        @pl.when(l == nl - 1)
        def _():
            out_ref[...] = h_new                                    # only final layer hits HBM


# ------------------------------ pallas_call wrappers ---------------------------- #

def pallas_pre_linear(x_pad, w_pre, b_pre, *, tile):
    """x_pad:[Np,Cin_p] bf16, w_pre:[Cin_p,Hp] bf16, b_pre:[1,Hp] f32
       -> (h0_f32:[Np,Hp], h0_bf16:[Np,Hp])."""
    n_pad, cin_pad = x_pad.shape
    h_pad = w_pre.shape[1]
    return pl.pallas_call(
        _pre_linear_kernel,
        out_shape=(
            jax.ShapeDtypeStruct((n_pad, h_pad), jnp.float32),
            jax.ShapeDtypeStruct((n_pad, h_pad), jnp.bfloat16),
        ),
        grid_spec=pltpu.PrefetchScalarGridSpec(
            num_scalar_prefetch=0,
            grid=(n_pad // tile,),
            in_specs=[
                pl.BlockSpec((tile, cin_pad), lambda i: (i, 0)),
                pl.BlockSpec((cin_pad, h_pad), lambda i: (0, 0)),
                pl.BlockSpec((1, h_pad), lambda i: (0, 0)),
            ],
            out_specs=(
                pl.BlockSpec((tile, h_pad), lambda i: (i, 0)),
                pl.BlockSpec((tile, h_pad), lambda i: (i, 0)),
            ),
        ),
        compiler_params=pltpu.CompilerParams(
            dimension_semantics=("parallel",),   # independent row tiles
            vmem_limit_bytes=_vmem_limit_bytes(),
        ),
    )(x_pad, w_pre, b_pre)


def pallas_gcn_chain(a_hat, h0_bf16, w_convs, b_convs, *, tile):
    """a_hat:[Np,Np] bf16, h0_bf16:[Np,Hp] bf16, w_convs:[L,Hp,Hp] bf16, b_convs:[L,1,Hp] f32."""
    n_pad = a_hat.shape[0]
    h_pad = h0_bf16.shape[1]
    num_layers = w_convs.shape[0]
    nt = n_pad // tile
    kernel = functools.partial(_gcn_chain_kernel, tm=tile, tk=tile)

    # Intermediate layers never change the out block index, so nothing is flushed to HBM
    # until the final layer's row tiles are written (saves (L-1)*Np*Hp*4 bytes of writes
    # and removes the old "last write wins" ordering dependence).
    def out_index(l, i, k):
        return (jnp.where(l == num_layers - 1, i, 0), 0)

    # Resident VMEM budget (must fit under vmem_limit): 4*Np*Hp bytes (h_buf bf16 +
    # tmp_buf bf16) + tile*Hp*4 (acc) + double-buffered A/W/out tiles.
    # TODO(synk): for graphs where 4*Np*Hp approaches the VMEM limit (esp. v7x 64 MiB),
    # fall back to an HBM-resident h^l with per-tile make_async_copy gathers.
    return pl.pallas_call(
        kernel,
        out_shape=jax.ShapeDtypeStruct((n_pad, h_pad), jnp.float32),
        grid_spec=pltpu.PrefetchScalarGridSpec(
            num_scalar_prefetch=0,
            grid=(num_layers, nt, nt),
            in_specs=[
                pl.BlockSpec(memory_space=pl.ANY),                            # h^0 (HBM, one-shot DMA)
                pl.BlockSpec((tile, tile), lambda l, i, k: (i, k)),           # A_hat tile (main stream)
                pl.BlockSpec((1, h_pad, h_pad), lambda l, i, k: (l, 0, 0)),   # W_l (DMA'd once per layer)
                pl.BlockSpec((1, 1, h_pad), lambda l, i, k: (l, 0, 0)),       # b_l
            ],
            out_specs=pl.BlockSpec((tile, h_pad), out_index),
            scratch_shapes=[
                pltpu.VMEM((n_pad, h_pad), jnp.bfloat16),   # resident h^l (bf16: MXU input dtype)
                pltpu.VMEM((n_pad, h_pad), jnp.bfloat16),   # resident h^l @ W_l
                pltpu.VMEM((tile, h_pad), jnp.float32),     # f32 row-tile accumulator
                pltpu.SemaphoreType.DMA,                    # one-shot h^0 bootstrap copy
            ],
        ),
        compiler_params=pltpu.CompilerParams(
            # Layers are inherently serial and the VMEM-resident activations are shared
            # across row tiles, so all axes are sequential.
            # TODO(synk): on v7x this leaves the second TensorCore idle; a row-sharded
            # variant (per-core copy of tmp_buf, or per-layer calls with a 'parallel'
            # row axis) would use both cores.
            dimension_semantics=("arbitrary", "arbitrary", "arbitrary"),
            vmem_limit_bytes=_vmem_limit_bytes(),
        ),
        # TODO(synk): if DMA latency shows exposed at tile<=256, add
        # pipeline_mode=pl.Buffered(3) on the A_hat BlockSpec only.
    )(h0_bf16, a_hat, w_convs, b_convs)


# -------------------------------- plain-JAX glue -------------------------------- #

def build_normalized_adjacency(edge_index, num_nodes, padded_nodes):
    """Dense D^{-1/2}(A+I)D^{-1/2} at padded size (zero pad rows/cols), matching PyG
    gcn_norm with add_self_loops=True. Duplicate edges accumulate (scatter-add), same as
    the reference below."""
    # TODO(synk): for realistically sparse graphs replace this dense O(N^2) matrix (the
    # dominant HBM stream) with a CSR / scalar-prefetch gather formulation, or quantize
    # A_hat (int8 on v5e/v6e, fp8 on v7x) to halve its traffic.
    src, dst = edge_index[0], edge_index[1]
    loop = jnp.arange(num_nodes, dtype=src.dtype)
    src = jnp.concatenate([src, loop])
    dst = jnp.concatenate([dst, loop])
    # A[i, j] = (# of) edges j -> i   (source_to_target flow)
    a = jnp.zeros((padded_nodes, padded_nodes), jnp.float32).at[dst, src].add(1.0)
    deg = a.sum(axis=1)                               # in-degree incl. self loop
    dinv = jnp.where(deg > 0, 1.0 / jnp.sqrt(jnp.maximum(deg, 1.0)), 0.0)
    return dinv[:, None] * a * dinv[None, :]


def init_params(key, in_channels, hidden_channels, num_layers):
    """Logical (torch-layout, f32) parameters."""
    keys = jax.random.split(key, 2 + num_layers)
    scale_pre = (2.0 / (in_channels + hidden_channels)) ** 0.5
    scale_h = (2.0 / (2 * hidden_channels)) ** 0.5
    params = {
        "w_pre": scale_pre
        * jax.random.normal(keys[0], (hidden_channels, in_channels), jnp.float32),
        "b_pre": 0.01 * jax.random.normal(keys[1], (hidden_channels,), jnp.float32),
        "convs": [],
    }
    for l in range(num_layers):
        w = scale_h * jax.random.normal(
            keys[2 + l], (hidden_channels, hidden_channels), jnp.float32
        )
        b = jnp.zeros((hidden_channels,), jnp.float32)  # GCNConv bias init: zeros_
        params["convs"].append((w, b))
    return params


def prepare_params(params, in_channels, hidden_channels):
    """One-time: transpose to [in,out], zero-pad channels to 128 lanes, stack layers,
    cast matmul operands to bf16 (biases stay f32)."""
    cin_pad = _round_up(in_channels, _LANE)
    h_pad = _round_up(hidden_channels, _LANE)
    w_pre = (
        jnp.zeros((cin_pad, h_pad), jnp.float32)
        .at[:in_channels, :hidden_channels].set(params["w_pre"].T)
    )
    b_pre = jnp.zeros((1, h_pad), jnp.float32).at[0, :hidden_channels].set(params["b_pre"])
    num_layers = len(params["convs"])
    w_convs = jnp.zeros((num_layers, h_pad, h_pad), jnp.float32)
    b_convs = jnp.zeros((num_layers, 1, h_pad), jnp.float32)
    for l, (w, b) in enumerate(params["convs"]):
        w_convs = w_convs.at[l, :hidden_channels, :hidden_channels].set(w.T)
        b_convs = b_convs.at[l, 0, :hidden_channels].set(b)
    return {
        "w_pre": w_pre.astype(jnp.bfloat16),
        "b_pre": b_pre,
        "w_convs": w_convs.astype(jnp.bfloat16),
        "b_convs": b_convs,
    }


def schema_gcn_forward(prepared, x, edge_index, *, in_channels, hidden_channels):
    """Mirrors SchemaGCN.forward: returns (x_after_convs, ori_x)."""
    num_nodes = x.shape[0]
    n_pad, tile = _node_tiling(num_nodes)
    cin_pad = prepared["w_pre"].shape[0]

    # Zero-padded, bf16 node features (padded rows/cols contribute nothing downstream:
    # padded A rows/cols are zero, padded weight rows/cols are zero).
    x_pad = (
        jnp.zeros((n_pad, cin_pad), jnp.bfloat16)
        .at[:num_nodes, :in_channels].set(x.astype(jnp.bfloat16))
    )
    a_hat = build_normalized_adjacency(edge_index, num_nodes, n_pad).astype(jnp.bfloat16)

    h0_f32, h0_bf16 = pallas_pre_linear(
        x_pad, prepared["w_pre"], prepared["b_pre"], tile=tile
    )
    out_pad = pallas_gcn_chain(
        a_hat, h0_bf16, prepared["w_convs"], prepared["b_convs"], tile=tile
    )

    ori_x = h0_f32[:num_nodes, :hidden_channels]
    out = out_pad[:num_nodes, :hidden_channels]
    return out, ori_x


def schema_gcn_reference(params, x, edge_index):
    """Pure-jnp f32 reference for correctness checking."""
    num_nodes = x.shape[0]
    a_hat = build_normalized_adjacency(edge_index, num_nodes, num_nodes)
    h = x @ params["w_pre"].T + params["b_pre"]
    ori_x = h
    for w, b in params["convs"]:
        h = jnp.maximum(a_hat @ (h @ w.T) + b, 0.0)
    return h, ori_x


# ------------------------------------- main -------------------------------------- #

if __name__ == "__main__":
    num_nodes = 16
    in_channels = 12
    hidden_channels = 32
    num_layers = 2
    num_edges = 48

    key = jax.random.PRNGKey(0)
    k_x, k_e, k_p = jax.random.split(key, 3)

    x = jax.random.normal(k_x, (num_nodes, in_channels), jnp.float32)
    edge_index = jax.random.randint(k_e, (2, num_edges), 0, num_nodes, jnp.int32)

    params = init_params(k_p, in_channels, hidden_channels, num_layers)
    prepared = prepare_params(params, in_channels, hidden_channels)

    fwd = jax.jit(
        functools.partial(
            schema_gcn_forward,
            in_channels=in_channels,
            hidden_channels=hidden_channels,
        )
    )

    out, ori = fwd(prepared, x, edge_index)
    out = jax.block_until_ready(out)
    ori = jax.block_until_ready(ori)

    ref_out, ref_ori = schema_gcn_reference(params, x, edge_index)
    # bf16 MXU operands (f32 accumulation) vs pure-f32 reference -> loosened tolerance.
    assert jnp.allclose(ori, ref_ori, atol=5e-2, rtol=5e-2)
    assert jnp.allclose(out, ref_out, atol=5e-2, rtol=5e-2)

    print("KERNEL_OK")
</pallas_src>

<mosaic_0001>
module attributes {stable_mosaic.version = 11 : i64} {
  func.func @_pre_linear_kernel(%arg0: i32, %arg1: memref<128x128xbf16, #tpu.memory_space<vmem>>, %arg2: memref<128x128xbf16, #tpu.memory_space<vmem>>, %arg3: memref<1x128xf32, #tpu.memory_space<vmem>>, %arg4: memref<128x128xf32, #tpu.memory_space<vmem>>, %arg5: memref<128x128xbf16, #tpu.memory_space<vmem>>) attributes {dimension_semantics = [#tpu.dimension_semantics<parallel>], iteration_bounds = array<i64: 1>, scalar_prefetch = 0 : i64, scratch_operands = 0 : i64, tpu.core_type = #tpu.core_type<tc>, window_params = [{transform_indices = @transform_0, window_bounds = array<i64: 128, 128>}, {pipeline_mode = #tpu.pipeline_mode<synchronous>, transform_indices = @transform_1, window_bounds = array<i64: 128, 128>}, {pipeline_mode = #tpu.pipeline_mode<synchronous>, transform_indices = @transform_2, window_bounds = array<i64: 1, 128>}, {transform_indices = @transform_3, window_bounds = array<i64: 128, 128>}, {transform_indices = @transform_4, window_bounds = array<i64: 128, 128>}]} {
    %c0 = arith.constant 0 : index
    %c0_0 = arith.constant 0 : index
    %0 = vector.load %arg1[%c0, %c0_0] : memref<128x128xbf16, #tpu.memory_space<vmem>>, vector<128x128xbf16>
    %c0_1 = arith.constant 0 : index
    %c0_2 = arith.constant 0 : index
    %1 = vector.load %arg2[%c0_1, %c0_2] : memref<128x128xbf16, #tpu.memory_space<vmem>>, vector<128x128xbf16>
    %cst = arith.constant dense<0.000000e+00> : vector<128x128xf32>
    %2 = tpu.matmul %0, %1, %cst {dimension_numbers = #tpu.dot_dimension_numbers<[1], [0], [0], [1], [0, 0, 1, 1], [], []>} : vector<128x128xbf16>, vector<128x128xbf16>, vector<128x128xf32> -> vector<128x128xf32>
    %c0_3 = arith.constant 0 : index
    %c0_4 = arith.constant 0 : index
    %3 = vector.load %arg3[%c0_3, %c0_4] : memref<1x128xf32, #tpu.memory_space<vmem>>, vector<1x128xf32>
    %4 = vector.broadcast %3 : vector<1x128xf32> to vector<128x128xf32>
    %5 = arith.addf %2, %4 : vector<128x128xf32>
    %c0_5 = arith.constant 0 : index
    %c0_6 = arith.constant 0 : index
    %6 = vector.load %arg4[%c0_5, %c0_6] : memref<128x128xf32, #tpu.memory_space<vmem>>, vector<128x128xf32>
    tpu.vector_store %arg4[%c0_5, %c0_6], %5 {strides = array<i32>} : memref<128x128xf32, #tpu.memory_space<vmem>>, vector<128x128xf32>,
    %7 = arith.truncf %5 : vector<128x128xf32> to vector<128x128xbf16>
    %c0_7 = arith.constant 0 : index
    %c0_8 = arith.constant 0 : index
    %8 = vector.load %arg5[%c0_7, %c0_8] : memref<128x128xbf16, #tpu.memory_space<vmem>>, vector<128x128xbf16>
    tpu.vector_store %arg5[%c0_7, %c0_8], %7 {strides = array<i32>} : memref<128x128xbf16, #tpu.memory_space<vmem>>, vector<128x128xbf16>,
    return
  }
  func.func @transform_0(%arg0: i32) -> (i32, i32) {
    %c0_i32 = arith.constant 0 : i32
    %c0_i32_0 = arith.constant 0 : i32
    return %arg0, %c0_i32 : i32, i32
  }
  func.func @transform_1(%arg0: i32) -> (i32, i32) {
    %c0_i32 = arith.constant 0 : i32
    %c0_i32_0 = arith.constant 0 : i32
    %c0_i32_1 = arith.constant 0 : i32
    return %c0_i32, %c0_i32_0 : i32, i32
  }
  func.func @transform_2(%arg0: i32) -> (i32, i32) {
    %c0_i32 = arith.constant 0 : i32
    %c0_i32_0 = arith.constant 0 : i32
    %c0_i32_1 = arith.constant 0 : i32
    return %c0_i32, %c0_i32_0 : i32, i32
  }
  func.func @transform_3(%arg0: i32) -> (i32, i32) {
    %c0_i32 = arith.constant 0 : i32
    %c0_i32_0 = arith.constant 0 : i32
    return %arg0, %c0_i32 : i32, i32
  }
  func.func @transform_4(%arg0: i32) -> (i32, i32) {
    %c0_i32 = arith.constant 0 : i32
    %c0_i32_0 = arith.constant 0 : i32
    return %arg0, %c0_i32 : i32, i32
  }
}

module attributes {stable_mosaic.version = 11 : i64} {
  func.func @_gcn_chain_kernel(%arg0: i32, %arg1: i32, %arg2: i32, %arg3: memref<128x128xbf16, #tpu.memory_space<any>>, %arg4: memref<128x128xbf16, #tpu.memory_space<vmem>>, %arg5: memref<1x128x128xbf16, #tpu.memory_space<vmem>>, %arg6: memref<1x1x128xf32, #tpu.memory_space<vmem>>, %arg7: memref<128x128xf32, #tpu.memory_space<vmem>>, %arg8: memref<128x128xbf16, #tpu.memory_space<vmem>>, %arg9: memref<128x128xbf16, #tpu.memory_space<vmem>>, %arg10: memref<128x128xf32, #tpu.memory_space<vmem>>, %arg11: memref<!tpu.dma_semaphore, #tpu.memory_space<semaphore_mem>>) attributes {dimension_semantics = [#tpu.dimension_semantics<arbitrary>, #tpu.dimension_semantics<arbitrary>, #tpu.dimension_semantics<arbitrary>], iteration_bounds = array<i64: 2, 1, 1>, scalar_prefetch = 0 : i64, scratch_operands = 4 : i64, tpu.core_type = #tpu.core_type<tc>, window_params = [{}, {transform_indices = @transform_1, window_bounds = array<i64: 128, 128>}, {transform_indices = @transform_2, window_bounds = array<i64: 1, 128, 128>}, {transform_indices = @transform_3, window_bounds = array<i64: 1, 1, 128>}, {transform_indices = @transform_4, window_bounds = array<i64: 128, 128>}]} {
    %c128_i32 = arith.constant 128 : i32
    %0 = arith.muli %arg2, %c128_i32 : i32
    %1 = tpu.assume_multiple %0, 128 : i32
    %c0_i32 = arith.constant 0 : i32
    %2 = arith.cmpi eq, %arg0, %c0_i32 : i32
    %c0_i32_0 = arith.constant 0 : i32
    %3 = arith.cmpi eq, %arg1, %c0_i32_0 : i32
    %4 = arith.andi %2, %3 : i1
    %c0_i32_1 = arith.constant 0 : i32
    %5 = arith.cmpi eq, %arg2, %c0_i32_1 : i32
    %6 = arith.andi %4, %5 : i1
    %7 = arith.extui %6 : i1 to i32
    %c0_i32_2 = arith.constant 0 : i32
    %8 = arith.cmpi ne, %7, %c0_i32_2 : i32
    scf.if %8 {
      tpu.enqueue_dma source(%arg3 : memref<128x128xbf16, #tpu.memory_space<any>>) target(%arg8 : memref<128x128xbf16, #tpu.memory_space<vmem>>) target_semaphore(%arg11 : memref<!tpu.dma_semaphore, #tpu.memory_space<semaphore_mem>>)
      tpu.wait_dma2 semaphore(%arg11 : memref<!tpu.dma_semaphore, #tpu.memory_space<semaphore_mem>>) src(%arg3 : memref<128x128xbf16, #tpu.memory_space<any>>) dst(%arg8 : memref<128x128xbf16, #tpu.memory_space<vmem>>)
    } else {
    }
    %c0_i32_3 = arith.constant 0 : i32
    %9 = arith.cmpi eq, %arg1, %c0_i32_3 : i32
    %10 = arith.extui %9 : i1 to i32
    %c0_i32_4 = arith.constant 0 : i32
    %11 = arith.cmpi ne, %10, %c0_i32_4 : i32
    scf.if %11 {
      %25 = arith.index_cast %1 : i32 to index
      %c0_15 = arith.constant 0 : index
      %26 = vector.load %arg8[%25, %c0_15] : memref<128x128xbf16, #tpu.memory_space<vmem>>, vector<128x128xbf16>
      %c0_16 = arith.constant 0 : index
      %c0_17 = arith.constant 0 : index
      %c0_18 = arith.constant 0 : index
      %27 = vector.load %arg5[%c0_16, %c0_17, %c0_18] : memref<1x128x128xbf16, #tpu.memory_space<vmem>>, vector<1x128x128xbf16>
      %28 = vector.shape_cast %27 : vector<1x128x128xbf16> to vector<128x128xbf16>
      %cst_19 = arith.constant dense<0.000000e+00> : vector<128x128xf32>
      %29 = tpu.matmul %26, %28, %cst_19 {dimension_numbers = #tpu.dot_dimension_numbers<[1], [0], [0], [1], [0, 0, 1, 1], [], []>} : vector<128x128xbf16>, vector<128x128xbf16>, vector<128x128xf32> -> vector<128x128xf32>
      %30 = arith.truncf %29 : vector<128x128xf32> to vector<128x128xbf16>
      %31 = arith.index_cast %1 : i32 to index
      %c0_20 = arith.constant 0 : index
      %32 = vector.load %arg9[%31, %c0_20] : memref<128x128xbf16, #tpu.memory_space<vmem>>, vector<128x128xbf16>
      tpu.vector_store %arg9[%31, %c0_20], %30 {strides = array<i32>} : memref<128x128xbf16, #tpu.memory_space<vmem>>, vector<128x128xbf16>,
    } else {
    }
    %c0_i32_5 = arith.constant 0 : i32
    %12 = arith.cmpi eq, %arg2, %c0_i32_5 : i32
    %13 = arith.extui %12 : i1 to i32
    %c0_i32_6 = arith.constant 0 : i32
    %14 = arith.cmpi ne, %13, %c0_i32_6 : i32
    scf.if %14 {
      %cst_15 = arith.constant 0.000000e+00 : f32
      %25 = vector.broadcast %cst_15 : f32 to vector<128x128xf32>
      %c0_16 = arith.constant 0 : index
      %c0_17 = arith.constant 0 : index
      %26 = vector.load %arg10[%c0_16, %c0_17] : memref<128x128xf32, #tpu.memory_space<vmem>>, vector<128x128xf32>
      tpu.vector_store %arg10[%c0_16, %c0_17], %25 {strides = array<i32>} : memref<128x128xf32, #tpu.memory_space<vmem>>, vector<128x128xf32>,
    } else {
    }
    %c0 = arith.constant 0 : index
    %c0_7 = arith.constant 0 : index
    %15 = vector.load %arg10[%c0, %c0_7] : memref<128x128xf32, #tpu.memory_space<vmem>>, vector<128x128xf32>
    %c0_8 = arith.constant 0 : index
    %c0_9 = arith.constant 0 : index
    %16 = vector.load %arg4[%c0_8, %c0_9] : memref<128x128xbf16, #tpu.memory_space<vmem>>, vector<128x128xbf16>
    %17 = arith.index_cast %1 : i32 to index
    %c0_10 = arith.constant 0 : index
    %18 = vector.load %arg9[%17, %c0_10] : memref<128x128xbf16, #tpu.memory_space<vmem>>, vector<128x128xbf16>
    %cst = arith.constant dense<0.000000e+00> : vector<128x128xf32>
    %19 = tpu.matmul %16, %18, %cst {dimension_numbers = #tpu.dot_dimension_numbers<[1], [0], [0], [1], [0, 0, 1, 1], [], []>} : vector<128x128xbf16>, vector<128x128xbf16>, vector<128x128xf32> -> vector<128x128xf32>
    %20 = arith.addf %15, %19 : vector<128x128xf32>
    %c0_11 = arith.constant 0 : index
    %c0_12 = arith.constant 0 : index
    %21 = vector.load %arg10[%c0_11, %c0_12] : memref<128x128xf32, #tpu.memory_space<vmem>>, vector<128x128xf32>
    tpu.vector_store %arg10[%c0_11, %c0_12], %20 {strides = array<i32>} : memref<128x128xf32, #tpu.memory_space<vmem>>, vector<128x128xf32>,
    %c0_i32_13 = arith.constant 0 : i32
    %22 = arith.cmpi eq, %arg2, %c0_i32_13 : i32
    %23 = arith.extui %22 : i1 to i32
    %c0_i32_14 = arith.constant 0 : i32
    %24 = arith.cmpi ne, %23, %c0_i32_14 : i32
    scf.if %24 {
      %c0_15 = arith.constant 0 : index
      %c0_16 = arith.constant 0 : index
      %25 = vector.load %arg10[%c0_15, %c0_16] : memref<128x128xf32, #tpu.memory_space<vmem>>, vector<128x128xf32>
      %c0_17 = arith.constant 0 : index
      %c0_18 = arith.constant 0 : index
      %c0_19 = arith.constant 0 : index
      %26 = vector.load %arg6[%c0_17, %c0_18, %c0_19] : memref<1x1x128xf32, #tpu.memory_space<vmem>>, vector<1x1x128xf32>
      %27 = vector.shape_cast %26 : vector<1x1x128xf32> to vector<1x128xf32>
      %28 = vector.broadcast %27 : vector<1x128xf32> to vector<128x128xf32>
      %29 = arith.addf %25, %28 : vector<128x128xf32>
      %cst_20 = arith.constant 0.000000e+00 : f32
      %30 = vector.broadcast %cst_20 : f32 to vector<128x128xf32>
      %31 = arith.maximumf %29, %30 : vector<128x128xf32>
      %c128_i32_21 = arith.constant 128 : i32
      %32 = arith.muli %arg1, %c128_i32_21 : i32
      %33 = tpu.assume_multiple %32, 128 : i32
      %c1_i32 = arith.constant 1 : i32
      %34 = arith.cmpi slt, %arg0, %c1_i32 : i32
      %35 = arith.extui %34 : i1 to i32
      %c0_i32_22 = arith.constant 0 : i32
      %36 = arith.cmpi ne, %35, %c0_i32_22 : i32
      scf.if %36 {
        %40 = arith.truncf %31 : vector<128x128xf32> to vector<128x128xbf16>
        %41 = arith.index_cast %33 : i32 to index
        %c0_25 = arith.constant 0 : index
        %42 = vector.load %arg8[%41, %c0_25] : memref<128x128xbf16, #tpu.memory_space<vmem>>, vector<128x128xbf16>
        tpu.vector_store %arg8[%41, %c0_25], %40 {strides = array<i32>} : memref<128x128xbf16, #tpu.memory_space<vmem>>, vector<128x128xbf16>,
      } else {
      }
      %c1_i32_23 = arith.constant 1 : i32
      %37 = arith.cmpi eq, %arg0, %c1_i32_23 : i32
      %38 = arith.extui %37 : i1 to i32
      %c0_i32_24 = arith.constant 0 : i32
      %39 = arith.cmpi ne, %38, %c0_i32_24 : i32
      scf.if %39 {
        %c0_25 = arith.constant 0 : index
        %c0_26 = arith.constant 0 : index
        %40 = vector.load %arg7[%c0_25, %c0_26] : memref<128x128xf32, #tpu.memory_space<vmem>>, vector<128x128xf32>
        tpu.vector_store %arg7[%c0_25, %c0_26], %31 {strides = array<i32>} : memref<128x128xf32, #tpu.memory_space<vmem>>, vector<128x128xf32>,
      } else {
      }
    } else {
    }
    return
  }
  func.func @transform_1(%arg0: i32, %arg1: i32, %arg2: i32) -> (i32, i32) {
    %c0_i32 = arith.constant 0 : i32
    return %arg1, %arg2 : i32, i32
  }
  func.func @transform_2(%arg0: i32, %arg1: i32, %arg2: i32) -> (i32, i32, i32) {
    %c0_i32 = arith.constant 0 : i32
    %c0_i32_0 = arith.constant 0 : i32
    %c0_i32_1 = arith.constant 0 : i32
    return %arg0, %c0_i32, %c0_i32_0 : i32, i32, i32
  }
  func.func @transform_3(%arg0: i32, %arg1: i32, %arg2: i32) -> (i32, i32, i32) {
    %c0_i32 = arith.constant 0 : i32
    %c0_i32_0 = arith.constant 0 : i32
    %c0_i32_1 = arith.constant 0 : i32
    return %arg0, %c0_i32, %c0_i32_0 : i32, i32, i32
  }
  func.func @transform_4(%arg0: i32, %arg1: i32, %arg2: i32) -> (i32, i32) {
    %c1_i32 = arith.constant 1 : i32
    %0 = arith.cmpi eq, %arg0, %c1_i32 : i32
    %c0_i32 = arith.constant 0 : i32
    %1 = arith.select %0, %arg1, %c0_i32 : i32
    %c0_i32_0 = arith.constant 0 : i32
    %c0_i32_1 = arith.constant 0 : i32
    return %1, %c0_i32_0 : i32, i32
  }
}

</mosaic_0001>

<llo_original>
// kernel: schema_gcn_forward.2
$region0: #{schema_gcn_forward.2}
  #allocation0 [shape = 'u32[]', space=smem, size = 0x4, offset = 0x4, fixed_abs, tag = 'smem constant byte address 0x4 - core index']
  #allocation1 [shape = 'u32[72,128]{1,0:T(1,128)}', space=vmem, size = 0x9000, scoped, tag = 'internal scratch']
  %s0 = inlined_call_operand.vmem [shape: bf16[128,128], index: 0, kind: input, shape index: {}]
  %s1 = inlined_call_operand.vmem [shape: bf16[128,128], index: 1, kind: input, shape index: {}]
  %s2 = inlined_call_operand.vmem [shape: f32[1,128], index: 2, kind: input, shape index: {}]
  %s3 = inlined_call_operand.vmem [shape: f32[128,128], index: 3, kind: output, shape index: {0}]
  %s4 = inlined_call_operand.vmem [shape: bf16[128,128], index: 4, kind: output, shape index: {1}]
  %5 = xla_tuple %s3, %s4
  %s6 = sld [smem:[#allocation0]]
  $region30: #{schema_gcn_forward.2} parent=0
    _
  %s8 = ssub.s32 1, %s6
  %s9 = scalar_select 0, %s8, %s6
  // Predicated region
  $region2: #{schema_gcn_forward.2} parent=0 // pred_check
    _
  $region3: #{schema_gcn_forward.2} parent=0 // pred_check_branch
    %11 = sbr.rel (0) target = $region5
  $region4: #{schema_gcn_forward.2} parent=0 // pred_region
    _
  $region5: #{schema_gcn_forward.2} parent=0 // pred_fallthru
    _
  // Predicated region
  $region6: #{schema_gcn_forward.2} parent=0 // pred_check
    _
  $region7: #{schema_gcn_forward.2} parent=0 // pred_check_branch
    %13 = sbr.rel (0) target = $region9
  $region8: #{schema_gcn_forward.2} parent=0 // pred_region
    _
  $region9: #{schema_gcn_forward.2} parent=0 // pred_fallthru
    _
  // Predicated region
  $region10: #{schema_gcn_forward.2} parent=0 // pred_check
    _
  $region11: #{schema_gcn_forward.2} parent=0 // pred_check_branch
    %15 = sbr.rel (0) target = $region13
  $region12: #{schema_gcn_forward.2} parent=0 // pred_region
    _
  $region13: #{schema_gcn_forward.2} parent=0 // pred_fallthru
    _
  %v16 = vld [vmem:[%s0] sm:$0xf]
  %v17 = vld [vmem:[%s0 + $0x4] sm:$0xf]
  %v18 = vld [vmem:[%s0 + $0x8] sm:$0xf]
  %v19 = vld [vmem:[%s0 + $0xc] sm:$0xf]
  %v20 = vld [vmem:[%s0 + $0x10] sm:$0xf]
  %v21 = vld [vmem:[%s0 + $0x14] sm:$0xf]
  %v22 = vld [vmem:[%s0 + $0x18] sm:$0xf]
  %v23 = vld [vmem:[%s0 + $0x1c] sm:$0xf]
  %v24 = vld [vmem:[%s0 + $0x20] sm:$0xf]
  %v25 = vld [vmem:[%s0 + $0x24] sm:$0xf]
  %v26 = vld [vmem:[%s0 + $0x28] sm:$0xf]
  %v27 = vld [vmem:[%s0 + $0x2c] sm:$0xf]
  %v28 = vld [vmem:[%s0 + $0x30] sm:$0xf]
  %v29 = vld [vmem:[%s0 + $0x34] sm:$0xf]
  %v30 = vld [vmem:[%s0 + $0x38] sm:$0xf]
  %v31 = vld [vmem:[%s0 + $0x3c] sm:$0xf]
  %v32 = vld [vmem:[%s1] sm:$0xf]
  %v33 = vld [vmem:[%s1 + $0x4] sm:$0xf]
  %v34 = vld [vmem:[%s1 + $0x8] sm:$0xf]
  %v35 = vld [vmem:[%s1 + $0xc] sm:$0xf]
  %v36 = vld [vmem:[%s1 + $0x10] sm:$0xf]
  %v37 = vld [vmem:[%s1 + $0x14] sm:$0xf]
  %v38 = vld [vmem:[%s1 + $0x18] sm:$0xf]
  %v39 = vld [vmem:[%s1 + $0x1c] sm:$0xf]
  %v40 = vld [vmem:[%s1 + $0x20] sm:$0xf]
  %v41 = vld [vmem:[%s1 + $0x24] sm:$0xf]
  %v42 = vld [vmem:[%s1 + $0x28] sm:$0xf]
  %v43 = vld [vmem:[%s1 + $0x2c] sm:$0xf]
  %v44 = vld [vmem:[%s1 + $0x30] sm:$0xf]
  %v45 = vld [vmem:[%s1 + $0x34] sm:$0xf]
  %v46 = vld [vmem:[%s1 + $0x38] sm:$0xf]
  %v47 = vld [vmem:[%s1 + $0x3c] sm:$0xf]
  %v48 = vld [vmem:[%s2] sm:$0x1]
  %v50 = vperm.slane %v48, 0
  %v68 = vunpack.c.l.b16 %v16
  %v69 = vunpack.c.l.b16 %v17
  %v70 = vunpack.c.l.b16 %v18
  %v71 = vunpack.c.l.b16 %v19
  %v72 = vunpack.c.l.b16 %v20
  %v73 = vunpack.c.l.b16 %v21
  %v74 = vunpack.c.l.b16 %v22
  %v75 = vunpack.c.l.b16 %v23
  %v76 = vunpack.c.l.b16 %v24
  %v77 = vunpack.c.l.b16 %v25
  %v78 = vunpack.c.l.b16 %v26
  %v79 = vunpack.c.l.b16 %v27
  %v80 = vunpack.c.l.b16 %v28
  %v81 = vunpack.c.l.b16 %v29
  %v82 = vunpack.c.l.b16 %v30
  %v83 = vunpack.c.l.b16 %v31
  %v84 = vpack.c.b16 %v69, %v68
  %v85 = vpack.c.b16 %v71, %v70
  %v86 = vpack.c.b16 %v73, %v72
  %v87 = vpack.c.b16 %v75, %v74
  %v88 = vpack.c.b16 %v77, %v76
  %v89 = vpack.c.b16 %v79, %v78
  %v90 = vpack.c.b16 %v81, %v80
  %v91 = vpack.c.b16 %v83, %v82
  %v116 = vunpack.c.l.b16 %v32
  %v117 = vunpack.c.l.b16 %v33
  %v118 = vunpack.c.l.b16 %v34
  %v119 = vunpack.c.l.b16 %v35
  %v120 = vunpack.c.l.b16 %v36
  %v121 = vunpack.c.l.b16 %v37
  %v122 = vunpack.c.l.b16 %v38
  %v123 = vunpack.c.l.b16 %v39
  %v124 = vunpack.c.l.b16 %v40
  %v125 = vunpack.c.l.b16 %v41
  %v126 = vunpack.c.l.b16 %v42
  %v127 = vunpack.c.l.b16 %v43
  %v128 = vunpack.c.l.b16 %v44
  %v129 = vunpack.c.l.b16 %v45
  %v130 = vunpack.c.l.b16 %v46
  %v131 = vunpack.c.l.b16 %v47
  %v132 = vpack.c.b16 %v117, %v116
  %v133 = vpack.c.b16 %v119, %v118
  %v134 = vpack.c.b16 %v121, %v120
  %v135 = vpack.c.b16 %v123, %v122
  %v136 = vpack.c.b16 %v125, %v124
  %v137 = vpack.c.b16 %v127, %v126
  %v138 = vpack.c.b16 %v129, %v128
  %v139 = vpack.c.b16 %v131, %v130
  %148 = vmatpush.bf16.msra.mxu0 %v139
  %149 = vmatpush.bf16.msra.mxu0 %v138
  %150 = vmatpush.bf16.msra.mxu0 %v137
  %151 = vmatpush.bf16.msra.mxu0 %v136
  %152 = vmatpush.bf16.msra.mxu0 %v135
  %153 = vmatpush.bf16.msra.mxu0 %v134
  %154 = vmatpush.bf16.msra.mxu0 %v133
  %155 = vmatpush.bf16.msra.mxu0 %v132
  %156 = vmatmul.bf16.gmra.mxu0 %v84
  %v157 = vpop.f32.mrf.mxu0
  %v158 = vadd.f32 %v50, %v157
  %v159 = vpop.f32.mrf.mxu0
  %v160 = vadd.f32 %v50, %v159
  %161 = vmatmul.bf16.gmra.mxu0 %v85
  %v162 = vpop.f32.mrf.mxu0
  %v163 = vadd.f32 %v50, %v162
  %v164 = vpop.f32.mrf.mxu0
  %v165 = vadd.f32 %v50, %v164
  %166 = vmatmul.bf16.gmra.mxu0 %v86
  %v167 = vpop.f32.mrf.mxu0
  %v168 = vadd.f32 %v50, %v167
  %v169 = vpop.f32.mrf.mxu0
  %v170 = vadd.f32 %v50, %v169
  %171 = vmatmul.bf16.gmra.mxu0 %v87
  %v172 = vpop.f32.mrf.mxu0
  %v173 = vadd.f32 %v50, %v172
  %v174 = vpop.f32.mrf.mxu0
  %v175 = vadd.f32 %v50, %v174
  %176 = vmatmul.bf16.gmra.mxu0 %v88
  %v177 = vpop.f32.mrf.mxu0
  %v178 = vadd.f32 %v50, %v177
  %v179 = vpop.f32.mrf.mxu0
  %v180 = vadd.f32 %v50, %v179
  %181 = vmatmul.bf16.gmra.mxu0 %v89
  %v182 = vpop.f32.mrf.mxu0
  %v183 = vadd.f32 %v50, %v182
  %v184 = vpop.f32.mrf.mxu0
  %v185 = vadd.f32 %v50, %v184
  %186 = vmatmul.bf16.gmra.mxu0 %v90
  %v187 = vpop.f32.mrf.mxu0
  %v188 = vadd.f32 %v50, %v187
  %v189 = vpop.f32.mrf.mxu0
  %v190 = vadd.f32 %v50, %v189
  %191 = vmatmul.bf16.gmra.mxu0 %v91
  %v192 = vpop.f32.mrf.mxu0
  %v193 = vadd.f32 %v50, %v192
  %v194 = vpop.f32.mrf.mxu0
  %v195 = vadd.f32 %v50, %v194
  %196 = vdwg.mxu0
  %197 = vst [vmem:[%s3] sm:$0xff] %v158
  %198 = vst [vmem:[%s3 + $0x8] sm:$0xff] %v160
  %199 = vst [vmem:[%s3 + $0x10] sm:$0xff] %v163
  %200 = vst [vmem:[%s3 + $0x18] sm:$0xff] %v165
  %201 = vst [vmem:[%s3 + $0x20] sm:$0xff] %v168
  %202 = vst [vmem:[%s3 + $0x28] sm:$0xff] %v170
  %203 = vst [vmem:[%s3 + $0x30] sm:$0xff] %v173
  %204 = vst [vmem:[%s3 + $0x38] sm:$0xff] %v175
  %205 = vst [vmem:[%s3 + $0x40] sm:$0xff] %v178
  %206 = vst [vmem:[%s3 + $0x48] sm:$0xff] %v180
  %207 = vst [vmem:[%s3 + $0x50] sm:$0xff] %v183
  %208 = vst [vmem:[%s3 + $0x58] sm:$0xff] %v185
  %209 = vst [vmem:[%s3 + $0x60] sm:$0xff] %v188
  %210 = vst [vmem:[%s3 + $0x68] sm:$0xff] %v190
  %211 = vst [vmem:[%s3 + $0x70] sm:$0xff] %v193
  %212 = vst [vmem:[%s3 + $0x78] sm:$0xff] %v195
  %v213 = vpack.c.bf16 %v158, %v158
  %v214 = vpack.c.bf16 %v160, %v160
  %v215 = vpack.c.bf16 %v163, %v163
  %v216 = vpack.c.bf16 %v165, %v165
  %v217 = vpack.c.bf16 %v168, %v168
  %v218 = vpack.c.bf16 %v170, %v170
  %v219 = vpack.c.bf16 %v173, %v173
  %v220 = vpack.c.bf16 %v175, %v175
  %v221 = vpack.c.bf16 %v178, %v178
  %v222 = vpack.c.bf16 %v180, %v180
  %v223 = vpack.c.bf16 %v183, %v183
  %v224 = vpack.c.bf16 %v185, %v185
  %v225 = vpack.c.bf16 %v188, %v188
  %v226 = vpack.c.bf16 %v190, %v190
  %v227 = vpack.c.bf16 %v193, %v193
  %v228 = vpack.c.bf16 %v195, %v195
  %229 = vst [vmem:[%s4] sm:$0xf] %v213
  %230 = vst [vmem:[%s4 + $0x4] sm:$0xf] %v214
  %231 = vst [vmem:[%s4 + $0x8] sm:$0xf] %v215
  %232 = vst [vmem:[%s4 + $0xc] sm:$0xf] %v216
  %233 = vst [vmem:[%s4 + $0x10] sm:$0xf] %v217
  %234 = vst [vmem:[%s4 + $0x14] sm:$0xf] %v218
  %235 = vst [vmem:[%s4 + $0x18] sm:$0xf] %v219
  %236 = vst [vmem:[%s4 + $0x1c] sm:$0xf] %v220
  %237 = vst [vmem:[%s4 + $0x20] sm:$0xf] %v221
  %238 = vst [vmem:[%s4 + $0x24] sm:$0xf] %v222
  %239 = vst [vmem:[%s4 + $0x28] sm:$0xf] %v223
  %240 = vst [vmem:[%s4 + $0x2c] sm:$0xf] %v224
  %241 = vst [vmem:[%s4 + $0x30] sm:$0xf] %v225
  %242 = vst [vmem:[%s4 + $0x34] sm:$0xf] %v226
  %243 = vst [vmem:[%s4 + $0x38] sm:$0xf] %v227
  %244 = vst [vmem:[%s4 + $0x3c] sm:$0xf] %v228
  // Predicated region
  $region14: #{schema_gcn_forward.2} parent=0 // pred_check
    _
  $region15: #{schema_gcn_forward.2} parent=0 // pred_check_branch
    %246 = sbr.rel (0) target = $region17
  $region16: #{schema_gcn_forward.2} parent=0 // pred_region
    _
  $region17: #{schema_gcn_forward.2} parent=0 // pred_fallthru
    _
  // Predicated region
  $region18: #{schema_gcn_forward.2} parent=0 // pred_check
    _
  $region19: #{schema_gcn_forward.2} parent=0 // pred_check_branch
    %248 = sbr.rel (0) target = $region21
  $region20: #{schema_gcn_forward.2} parent=0 // pred_region
    _
  $region21: #{schema_gcn_forward.2} parent=0 // pred_fallthru
    _
  // Predicated region
  $region22: #{schema_gcn_forward.2} parent=0 // pred_check
    _
  $region23: #{schema_gcn_forward.2} parent=0 // pred_check_branch
    %250 = sbr.rel (0) target = $region25
  $region24: #{schema_gcn_forward.2} parent=0 // pred_region
    _
  $region25: #{schema_gcn_forward.2} parent=0 // pred_fallthru
    _
  // Predicated region
  $region26: #{schema_gcn_forward.2} parent=0 // pred_check
    _
  $region27: #{schema_gcn_forward.2} parent=0 // pred_check_branch
    %252 = sbr.rel (0) target = $region29
  $region28: #{schema_gcn_forward.2} parent=0 // pred_region
    _
  $region29: #{schema_gcn_forward.2} parent=0 // pred_fallthru
    _

// kernel: schema_gcn_forward.3
$region0: #{schema_gcn_forward.3}
  #allocation0 [shape = 'u32[]', space=smem, size = 0x4, offset = 0x4, fixed_abs, tag = 'smem constant byte address 0x4 - core index']
  #allocation1 [shape = 'u32[72,128]{1,0:T(1,128)}', space=vmem, size = 0x9000, scoped, tag = 'internal scratch']
  #allocation2 [shape = 'bf16[128,128]{1,0:T(8,128)(2,1)}', space=vmem, size = 0x8000, scoped, tag = 'scratch operand']
  #allocation3 [shape = 'bf16[128,128]{1,0:T(8,128)(2,1)}', space=vmem, size = 0x8000, scoped, tag = 'scratch operand']
  #allocation4 [shape = 'f32[128,128]{1,0:T(8,128)}', space=vmem, size = 0x10000, scoped, tag = 'scratch operand']
  #allocation5 [shape = 's32[1]{0}', space=sflag, size = 0x4, scoped, tag = 'scratch operand']
  #allocation6 [shape = 's32[]', space=sflag, size = 0x4, offset = 0, fixed_abs, tag = 'sflag constant byte address 0x0 - dummy sync flag']
  %s0 = inlined_call_operand.vmem [shape: bf16[128,128], index: 0, kind: input, shape index: {}]
  %s1 = inlined_call_operand.vmem [shape: bf16[128,128], index: 1, kind: input, shape index: {}]
  %s2 = inlined_call_operand.vmem [shape: bf16[2,128,128], index: 2, kind: input, shape index: {}]
  %s3 = inlined_call_operand.vmem [shape: f32[2,1,128], index: 3, kind: input, shape index: {}]
  %s4 = inlined_call_operand.vmem [shape: f32[128,128], index: 4, kind: output, shape index: {}]
  %s5 = sld [smem:[#allocation0]]
  $region88: #{schema_gcn_forward.3} parent=0
    _
  %s7 = ssub.s32 1, %s5
  %s8 = scalar_select 0, %s7, %s5
  loop: start=0, step=1, limit=4
  $region2: #{schema_gcn_forward.3} parent=0 // loop_pre_header
    _
  $region3: #{schema_gcn_forward.3} parent=0 // loop_header
    %s10 = sphi 0, %s14
    %p11 = scmp.ge.s32.totalorder %s10, 4
    %s17 = sphi 0, %s36
    %s18 = sphi 0, %s32
    %s19 = sphi 0, %s28
    %s20 = sphi 0, %s17
    %s21 = sphi 0, %s18
    %s22 = sphi 0, %s19
    %s23 = sphi 0, %s20
    %s24 = sphi 0, %s21
    %s25 = sphi 0, %s22
    %s41 = sphi 0, %s43
    %s44 = sphi 0, %s41
    %s45 = sphi 0, %s44
    %s61 = sphi 0, %s45
    %s67 = sphi 0, %s69
    %s70 = sphi 0, %s67
    %s71 = sphi 0, %s70
    %s87 = sphi 0, %s71
    %s93 = sphi 0, %s95
    %s96 = sphi 0, %s93
    %s97 = sphi 0, %s96
    %s113 = sphi 0, %s97
    %s123 = sphi 0, %s125
    %s126 = sphi 0, %s123
    %s127 = sphi 0, %s126
    %s143 = sphi 0, %s127
  $region4: #{schema_gcn_forward.3} parent=0 // loop_header_branch
    %13 = sbr.rel (%p11) target = $region8
  $region5: #{schema_gcn_forward.3} parent=0 // loop_body
    %s15 = ssub.s32 %s10, 1
    %s16 = ssub.s32 %s10, 2
    %s26 = sadd.s32 1, %s19
    %p27 = scmp.ge.s32.totalorder %s26, 1
    %s28 = scalar_select %p27, 0, %s26
    %s29 = sadd.s32 1, %s18
    %s30 = scalar_select %p27, %s29, %s18
    %p31 = scmp.ge.s32.totalorder %s30, 1
    %s32 = scalar_select %p31, 0, %s30
    %s33 = sadd.s32 1, %s17
    %s34 = scalar_select %p31, %s33, %s17
    %p35 = scmp.ge.s32.totalorder %s34, 2
    %s36 = scalar_select %p35, 0, %s34
    %s37 = ssub.s32 %s18, %s32
    %s38 = ssub.s32 %s19, %s28
    %s39 = sor.u32 %s37, %s38
    %p40 = scmp.eq.s32.totalorder %s39, 0
    %s42 = sadd.s32 %s41, 1
    %s43 = scalar_select %p40, %s41, %s42
    %p46 = pneg %p40
    %p47 = scmp.eq.s32.totalorder %s10, 1
    %p48 = por %p46, %p47
    %p49 = scmp.ne.s32.totalorder %s41, %s44
    %p50 = scmp.eq.s32.totalorder %s10, 0
    %p51 = por %p49, %p50
    %p52 = scmp.ne.s32.totalorder %s41, %s44
    %p53 = scmp.eq.s32.totalorder %s15, 1
    %p54 = por %p52, %p53
    %p55 = scmp.ne.s32.totalorder %s44, %s45
    %p56 = scmp.eq.s32.totalorder %s15, 0
    %p57 = por %p55, %p56
    %p58 = scmp.ne.s32.totalorder %s44, %s45
    %p59 = scmp.eq.s32.totalorder %s16, 1
    %p60 = por %p58, %p59
    %p62 = scmp.ne.s32.totalorder %s45, %s61
    %p63 = scmp.eq.s32.totalorder %s16, 0
    %p64 = por %p62, %p63
    %s65 = ssub.s32 %s17, %s36
    %p66 = scmp.eq.s32.totalorder %s65, 0
    %s68 = sadd.s32 %s67, 1
    %s69 = scalar_select %p66, %s67, %s68
    %p72 = pneg %p66
    %p73 = scmp.eq.s32.totalorder %s10, 1
    %p74 = por %p72, %p73
    %p75 = scmp.ne.s32.totalorder %s67, %s70
    %p76 = scmp.eq.s32.totalorder %s10, 0
    %p77 = por %p75, %p76
    %p78 = scmp.ne.s32.totalorder %s67, %s70
    %p79 = scmp.eq.s32.totalorder %s15, 1
    %p80 = por %p78, %p79
    %p81 = scmp.ne.s32.totalorder %s70, %s71
    %p82 = scmp.eq.s32.totalorder %s15, 0
    %p83 = por %p81, %p82
    %p84 = scmp.ne.s32.totalorder %s70, %s71
    %p85 = scmp.eq.s32.totalorder %s16, 1
    %p86 = por %p84, %p85
    %p88 = scmp.ne.s32.totalorder %s71, %s87
    %p89 = scmp.eq.s32.totalorder %s16, 0
    %p90 = por %p88, %p89
    %s91 = ssub.s32 %s17, %s36
    %p92 = scmp.eq.s32.totalorder %s91, 0
    %s94 = sadd.s32 %s93, 1
    %s95 = scalar_select %p92, %s93, %s94
    %p98 = pneg %p92
    %p99 = scmp.eq.s32.totalorder %s10, 1
    %p100 = por %p98, %p99
    %p101 = scmp.ne.s32.totalorder %s93, %s96
    %p102 = scmp.eq.s32.totalorder %s10, 0
    %p103 = por %p101, %p102
    %p104 = scmp.ne.s32.totalorder %s93, %s96
    %p105 = scmp.eq.s32.totalorder %s15, 1
    %p106 = por %p104, %p105
    %p107 = scmp.ne.s32.totalorder %s96, %s97
    %p108 = scmp.eq.s32.totalorder %s15, 0
    %p109 = por %p107, %p108
    %p110 = scmp.ne.s32.totalorder %s96, %s97
    %p111 = scmp.eq.s32.totalorder %s16, 1
    %p112 = por %p110, %p111
    %p114 = scmp.ne.s32.totalorder %s97, %s113
    %p115 = scmp.eq.s32.totalorder %s16, 0
    %p116 = por %p114, %p115
    %p117 = scmp.eq.s32.totalorder %s17, 1
    %s118 = scalar_select %p117, %s18, 0
    %p119 = scmp.eq.s32.totalorder %s36, 1
    %s120 = scalar_select %p119, %s32, 0
    %s121 = ssub.s32 %s118, %s120
    %p122 = scmp.eq.s32.totalorder %s121, 0
    %s124 = sadd.s32 %s123, 1
    %s125 = scalar_select %p122, %s123, %s124
    %p128 = pneg %p122
    %p129 = scmp.eq.s32.totalorder %s10, 1
    %p130 = por %p128, %p129
    %p131 = scmp.ne.s32.totalorder %s123, %s126
    %p132 = scmp.eq.s32.totalorder %s10, 0
    %p133 = por %p131, %p132
    %p134 = scmp.ne.s32.totalorder %s123, %s126
    %p135 = scmp.eq.s32.totalorder %s15, 1
    %p136 = por %p134, %p135
    %p137 = scmp.ne.s32.totalorder %s126, %s127
    %p138 = scmp.eq.s32.totalorder %s15, 0
    %p139 = por %p137, %p138
    %p140 = scmp.ne.s32.totalorder %s126, %s127
    %p141 = scmp.eq.s32.totalorder %s16, 1
    %p142 = por %p140, %p141
    %p144 = scmp.ne.s32.totalorder %s127, %s143
    %p145 = scmp.eq.s32.totalorder %s16, 0
    %p146 = por %p144, %p145
    %p147 = scmp.le.s32.totalorder 1, %s10
    %p148 = scmp.lt.s32.totalorder %s10, 3
    %p149 = pnand %p147, %p148
    %p150 = pneg %p149
    // Predicated region
    $region9: #{schema_gcn_forward.3} parent=5 // pred_check
      _
    $region10: #{schema_gcn_forward.3} parent=5 // pred_check_branch
      %152 = sbr.rel (%p149) target = $region12
    $region11: #{schema_gcn_forward.3} parent=5 // pred_region
      %s153 = ssub.s32 %s10, 1
      // Predicated region
      $region13: #{schema_gcn_forward.3} parent=11 // pred_check
        %p154 = pneg %p57
      $region14: #{schema_gcn_forward.3} parent=11 // pred_check_branch
        %156 = sbr.rel (%p154) target = $region16
      $region15: #{schema_gcn_forward.3} parent=11 // pred_region
        %s157 = smul.u32 16, %s21
        %p158 = scmp.lt.s32.totalorder %s157, 15
        %s159 = scalar_select %p158, %s157, 15
        %p160 = scmp.lt.s32.totalorder %s22, 0
        %s161 = scalar_select %p160, %s22, 0
        %s162 = sadd.s32 %s161, %s159
        %s163 = smul.addr %s162, 4
        %s164 = scalar_lea.vmem %s1, %s163
        %s165 = smul.u32 16, %s21
      $region16: #{schema_gcn_forward.3} parent=11 // pred_fallthru
        _
    $region12: #{schema_gcn_forward.3} parent=5 // pred_fallthru
      _
    %p166 = scmp.lt.s32.totalorder %s10, 2
    // Predicated region
    $region17: #{schema_gcn_forward.3} parent=5 // pred_check
      %p167 = pneg %p166
    $region18: #{schema_gcn_forward.3} parent=5 // pred_check_branch
      %169 = sbr.rel (%p167) target = $region20
    $region19: #{schema_gcn_forward.3} parent=5 // pred_region
      // Predicated region
      $region21: #{schema_gcn_forward.3} parent=19 // pred_check
        %p170 = pneg %p77
      $region22: #{schema_gcn_forward.3} parent=19 // pred_check_branch
        %172 = sbr.rel (%p170) target = $region24
      $region23: #{schema_gcn_forward.3} parent=19 // pred_region
        %p173 = scmp.lt.s32.totalorder %s17, 1
        %s174 = scalar_select %p173, %s17, 1
        %s175 = smul.addr %s174, 16
        %s176 = smul.addr %s175, 4
        %s177 = scalar_lea.vmem %s2, %s176
      $region24: #{schema_gcn_forward.3} parent=19 // pred_fallthru
        _
      // Predicated region
      $region25: #{schema_gcn_forward.3} parent=19 // pred_check
        %p178 = pneg %p103
      $region26: #{schema_gcn_forward.3} parent=19 // pred_check_branch
        %180 = sbr.rel (%p178) target = $region28
      $region27: #{schema_gcn_forward.3} parent=19 // pred_region
        %p181 = scmp.lt.s32.totalorder %s17, 1
        %s182 = scalar_select %p181, %s17, 1
        %s183 = scalar_lea.vmem %s3, %s182
      $region28: #{schema_gcn_forward.3} parent=19 // pred_fallthru
        _
    $region20: #{schema_gcn_forward.3} parent=5 // pred_fallthru
      _
    %p184 = scmp.le.s32.totalorder 1, %s10
    %p185 = scmp.lt.s32.totalorder %s10, 3
    %p186 = pnand %p184, %p185
    %p187 = pneg %p186
    // Predicated region
    $region29: #{schema_gcn_forward.3} parent=5 // pred_check
      _
    $region30: #{schema_gcn_forward.3} parent=5 // pred_check_branch
      %189 = sbr.rel (%p186) target = $region32
    $region31: #{schema_gcn_forward.3} parent=5 // pred_region
      %s190 = ssub.s32 %s10, 1
      %s191 = smul.u32 16, %s21
      %p192 = scmp.lt.s32.totalorder %s191, 15
      %s193 = scalar_select %p192, %s191, 15
      %p194 = scmp.lt.s32.totalorder %s22, 0
      %s195 = scalar_select %p194, %s22, 0
      %s196 = sadd.s32 %s195, %s193
      %s197 = smul.addr %s196, 4
      %s198 = scalar_lea.vmem %s1, %s197
      %p199 = pneg %p57
      %p200 = pneg %p54
      %p201 = scmp.lt.s32.totalorder %s20, 1
      %s202 = scalar_select %p201, %s20, 1
      %s203 = smul.addr %s202, 16
      %s204 = smul.addr %s203, 4
      %s205 = scalar_lea.vmem %s2, %s204
      %p206 = pneg %p83
      %p207 = pneg %p80
      %p208 = scmp.lt.s32.totalorder %s20, 1
      %s209 = scalar_select %p208, %s20, 1
      %s210 = scalar_lea.vmem %s3, %s209
      %p211 = pneg %p109
      %p212 = pneg %p106
      %p213 = pneg %p139
      %p214 = pneg %p136
      %p215 = scmp.eq.s32.totalorder %s20, 1
      %s216 = scalar_select %p215, %s21, 0
      %s217 = smul.u32 16, %s216
      %p218 = scmp.lt.s32.totalorder %s217, 15
      %s219 = scalar_select %p218, %s217, 15
      %s220 = smul.addr %s219, 8
      %s221 = scalar_lea.vmem %s4, %s220
      %s222 = smul.u32 16, %s21
      %p223 = scmp.lt.s32.totalorder %s222, 15
      %s224 = scalar_select %p223, %s222, 15
      %p225 = scmp.lt.s32.totalorder %s22, 0
      %s226 = scalar_select %p225, %s22, 0
      %s227 = sadd.s32 %s226, %s224
      %s228 = smul.addr %s227, 4
      %s229 = scalar_lea.vmem %s1, %s228
      %s230 = smul.u32 16, %s21
      %p231 = scmp.lt.s32.totalorder %s20, 1
      %s232 = scalar_select %p231, %s20, 1
      %s233 = smul.addr %s232, 16
      %s234 = smul.addr %s233, 4
      %s235 = scalar_lea.vmem %s2, %s234
      %p236 = scmp.lt.s32.totalorder %s20, 1
      %s237 = scalar_select %p236, %s20, 1
      %s238 = scalar_lea.vmem %s3, %s237
      %p239 = scmp.eq.s32.totalorder %s20, 1
      %s240 = scalar_select %p239, %s21, 0
      %s241 = smul.u32 16, %s240
      %p242 = scmp.lt.s32.totalorder %s241, 15
      %s243 = scalar_select %p242, %s241, 15
      %s244 = smul.addr %s243, 8
      %s245 = scalar_lea.vmem %s4, %s244
      %p246 = scmp.eq.s32.totalorder %s20, 1
      %s247 = scalar_select %p246, %s21, 0
      %s248 = smul.u32 16, %s247
      %s249 = smul.u32 %s22, 128
      %p250 = scmp.eq.s32.totalorder %s20, 0
      %p251 = scmp.eq.s32.totalorder %s21, 0
      %p252 = pnand %p250, %p251
      %p253 = pneg %p252
      %p254 = scmp.eq.s32.totalorder %s22, 0
      %p255 = pnand %p253, %p254
      %p256 = pneg %p255
      // Predicated region
      $region33: #{schema_gcn_forward.3} parent=31 // pred_check
        _
      $region34: #{schema_gcn_forward.3} parent=31 // pred_check_branch
        %258 = sbr.rel (%p255) target = $region36
      $region35: #{schema_gcn_forward.3} parent=31 // pred_region
        // Predicated region
        $region37: #{schema_gcn_forward.3} parent=35 // pred_check
          _
        $region38: #{schema_gcn_forward.3} parent=35 // pred_check_branch
          %260 = sbr.rel (0) target = $region40
        $region39: #{schema_gcn_forward.3} parent=35 // pred_region
          loop: start=0, step=1, limit=1
          $region41: #{schema_gcn_forward.3} parent=39 // loop_pre_header
            _
          $region42: #{schema_gcn_forward.3} parent=39 // loop_header
            %s262 = sphi 0, %s266
            %p263 = scmp.ge.s32.totalorder %s262, 1
            %s267 = sphi %s0, %s0
            %s268 = sphi [#allocation2], [#allocation2]
          $region43: #{schema_gcn_forward.3} parent=39 // loop_header_branch
            %265 = sbr.rel (%p263) target = $region47
          $region44: #{schema_gcn_forward.3} parent=39 // loop_body
            %v269 = vld [vmem:[%s267] sm:$0xff]
            %270 = vst [vmem:[%s268] sm:$0xff] %v269
            %v271 = vld [vmem:[%s267 + $0x8] sm:$0xff]
            %272 = vst [vmem:[%s268 + $0x8] sm:$0xff] %v271
            %v273 = vld [vmem:[%s267 + $0x10] sm:$0xff]
            %274 = vst [vmem:[%s268 + $0x10] sm:$0xff] %v273
            %v275 = vld [vmem:[%s267 + $0x18] sm:$0xff]
            %276 = vst [vmem:[%s268 + $0x18] sm:$0xff] %v275
            %v277 = vld [vmem:[%s267 + $0x20] sm:$0xff]
            %278 = vst [vmem:[%s268 + $0x20] sm:$0xff] %v277
            %v279 = vld [vmem:[%s267 + $0x28] sm:$0xff]
            %280 = vst [vmem:[%s268 + $0x28] sm:$0xff] %v279
            %v281 = vld [vmem:[%s267 + $0x30] sm:$0xff]
            %282 = vst [vmem:[%s268 + $0x30] sm:$0xff] %v281
            %v283 = vld [vmem:[%s267 + $0x38] sm:$0xff]
            %284 = vst [vmem:[%s268 + $0x38] sm:$0xff] %v283
          $region45: #{schema_gcn_forward.3} parent=39 // loop_footer
            %s266 = sadd.s32 1, %s262
          $region46: #{schema_gcn_forward.3} parent=39 // loop_footer_branch
            %261 = sbr.rel target = $region42
          $region47: #{schema_gcn_forward.3} parent=39 // loop_exit
            _
        $region40: #{schema_gcn_forward.3} parent=35 // pred_fallthru
          _
        // Predicated region
        $region48: #{schema_gcn_forward.3} parent=35 // pred_check
          _
        $region49: #{schema_gcn_forward.3} parent=35 // pred_check_branch
          %286 = sbr.rel target = $region51
        $region50: #{schema_gcn_forward.3} parent=35 // pred_region
          _
        $region51: #{schema_gcn_forward.3} parent=35 // pred_fallthru
          _
        // Predicated region
        $region52: #{schema_gcn_forward.3} parent=35 // pred_check
          _
        $region53: #{schema_gcn_forward.3} parent=35 // pred_check_branch
          %289 = sbr.rel (0) target = $region55
        $region54: #{schema_gcn_forward.3} parent=35 // pred_region
          %290 = vsyncadd [#allocation5], 1024
        $region55: #{schema_gcn_forward.3} parent=35 // pred_fallthru
          _
        %s291 = smul.u32 4, 16
        %s292 = smul.u32 %s291, 1
        %s293 = sshll.u32 %s292, 4
        %294 = dma.done [#allocation5], %s293
      $region36: #{schema_gcn_forward.3} parent=31 // pred_fallthru
        _
      // Predicated region
      $region56: #{schema_gcn_forward.3} parent=31 // pred_check
        %p295 = pneg %p251
      $region57: #{schema_gcn_forward.3} parent=31 // pred_check_branch
        %297 = sbr.rel (%p295) target = $region59
      $region58: #{schema_gcn_forward.3} parent=31 // pred_region
        %s298 = sshra.s32 %s249, 3
        %s299 = sand.u32 %s249, 7
        %s300 = smul.addr %s298, 4
        %s301 = scalar_lea.vmem [#allocation2], %s300
        %v302 = vld [vmem:[%s301] sm:$0xf]
        %v303 = vld [vmem:[%s301 + $0x4] sm:$0xf]
        %v304 = vld [vmem:[%s301 + $0x8] sm:$0xf]
        %v305 = vld [vmem:[%s301 + $0xc] sm:$0xf]
        %v306 = vld [vmem:[%s301 + $0x10] sm:$0xf]
        %v307 = vld [vmem:[%s301 + $0x14] sm:$0xf]
        %v308 = vld [vmem:[%s301 + $0x18] sm:$0xf]
        %v309 = vld [vmem:[%s301 + $0x1c] sm:$0xf]
        %v310 = vld [vmem:[%s301 + $0x20] sm:$0xf]
        %v311 = vld [vmem:[%s301 + $0x24] sm:$0xf]
        %v312 = vld [vmem:[%s301 + $0x28] sm:$0xf]
        %v313 = vld [vmem:[%s301 + $0x2c] sm:$0xf]
        %v314 = vld [vmem:[%s301 + $0x30] sm:$0xf]
        %v315 = vld [vmem:[%s301 + $0x34] sm:$0xf]
        %v316 = vld [vmem:[%s301 + $0x38] sm:$0xf]
        %v317 = vld [vmem:[%s301 + $0x3c] sm:$0xf]
        %v318 = vld [vmem:[%s235] sm:$0xf]
        %v319 = vld [vmem:[%s235 + $0x4] sm:$0xf]
        %v320 = vld [vmem:[%s235 + $0x8] sm:$0xf]
        %v321 = vld [vmem:[%s235 + $0xc] sm:$0xf]
        %v322 = vld [vmem:[%s235 + $0x10] sm:$0xf]
        %v323 = vld [vmem:[%s235 + $0x14] sm:$0xf]
        %v324 = vld [vmem:[%s235 + $0x18] sm:$0xf]
        %v325 = vld [vmem:[%s235 + $0x1c] sm:$0xf]
        %v326 = vld [vmem:[%s235 + $0x20] sm:$0xf]
        %v327 = vld [vmem:[%s235 + $0x24] sm:$0xf]
        %v328 = vld [vmem:[%s235 + $0x28] sm:$0xf]
        %v329 = vld [vmem:[%s235 + $0x2c] sm:$0xf]
        %v330 = vld [vmem:[%s235 + $0x30] sm:$0xf]
        %v331 = vld [vmem:[%s235 + $0x34] sm:$0xf]
        %v332 = vld [vmem:[%s235 + $0x38] sm:$0xf]
        %v333 = vld [vmem:[%s235 + $0x3c] sm:$0xf]
        %v350 = vunpack.c.l.b16 %v302
        %v351 = vunpack.c.l.b16 %v303
        %v352 = vunpack.c.l.b16 %v304
        %v353 = vunpack.c.l.b16 %v305
        %v354 = vunpack.c.l.b16 %v306
        %v355 = vunpack.c.l.b16 %v307
        %v356 = vunpack.c.l.b16 %v308
        %v357 = vunpack.c.l.b16 %v309
        %v358 = vunpack.c.l.b16 %v310
        %v359 = vunpack.c.l.b16 %v311
        %v360 = vunpack.c.l.b16 %v312
        %v361 = vunpack.c.l.b16 %v313
        %v362 = vunpack.c.l.b16 %v314
        %v363 = vunpack.c.l.b16 %v315
        %v364 = vunpack.c.l.b16 %v316
        %v365 = vunpack.c.l.b16 %v317
        %v366 = vpack.c.b16 %v351, %v350
        %v367 = vpack.c.b16 %v353, %v352
        %v368 = vpack.c.b16 %v355, %v354
        %v369 = vpack.c.b16 %v357, %v356
        %v370 = vpack.c.b16 %v359, %v358
        %v371 = vpack.c.b16 %v361, %v360
        %v372 = vpack.c.b16 %v363, %v362
        %v373 = vpack.c.b16 %v365, %v364
        %v398 = vunpack.c.l.b16 %v318
        %v399 = vunpack.c.l.b16 %v319
        %v400 = vunpack.c.l.b16 %v320
        %v401 = vunpack.c.l.b16 %v321
        %v402 = vunpack.c.l.b16 %v322
        %v403 = vunpack.c.l.b16 %v323
        %v404 = vunpack.c.l.b16 %v324
        %v405 = vunpack.c.l.b16 %v325
        %v406 = vunpack.c.l.b16 %v326
        %v407 = vunpack.c.l.b16 %v327
        %v408 = vunpack.c.l.b16 %v328
        %v409 = vunpack.c.l.b16 %v329
        %v410 = vunpack.c.l.b16 %v330
        %v411 = vunpack.c.l.b16 %v331
        %v412 = vunpack.c.l.b16 %v332
        %v413 = vunpack.c.l.b16 %v333
        %v414 = vpack.c.b16 %v399, %v398
        %v415 = vpack.c.b16 %v401, %v400
        %v416 = vpack.c.b16 %v403, %v402
        %v417 = vpack.c.b16 %v405, %v404
        %v418 = vpack.c.b16 %v407, %v406
        %v419 = vpack.c.b16 %v409, %v408
        %v420 = vpack.c.b16 %v411, %v410
        %v421 = vpack.c.b16 %v413, %v412
        %430 = vmatpush.bf16.msra.mxu0 %v421
        %431 = vmatpush.bf16.msra.mxu0 %v420
        %432 = vmatpush.bf16.msra.mxu0 %v419
        %433 = vmatpush.bf16.msra.mxu0 %v418
        %434 = vmatpush.bf16.msra.mxu0 %v417
        %435 = vmatpush.bf16.msra.mxu0 %v416
        %436 = vmatpush.bf16.msra.mxu0 %v415
        %437 = vmatpush.bf16.msra.mxu0 %v414
        %438 = vmatmul.bf16.gmra.mxu0 %v366
        %v439 = vpop.f32.mrf.mxu0
        %v440 = vadd.f32 0.0, %v439
        %v441 = vpop.f32.mrf.mxu0
        %v442 = vadd.f32 0.0, %v441
        %443 = vmatmul.bf16.gmra.mxu0 %v367
        %v444 = vpop.f32.mrf.mxu0
        %v445 = vadd.f32 0.0, %v444
        %v446 = vpop.f32.mrf.mxu0
        %v447 = vadd.f32 0.0, %v446
        %448 = vmatmul.bf16.gmra.mxu0 %v368
        %v449 = vpop.f32.mrf.mxu0
        %v450 = vadd.f32 0.0, %v449
        %v451 = vpop.f32.mrf.mxu0
        %v452 = vadd.f32 0.0, %v451
        %453 = vmatmul.bf16.gmra.mxu0 %v369
        %v454 = vpop.f32.mrf.mxu0
        %v455 = vadd.f32 0.0, %v454
        %v456 = vpop.f32.mrf.mxu0
        %v457 = vadd.f32 0.0, %v456
        %458 = vmatmul.bf16.gmra.mxu0 %v370
        %v459 = vpop.f32.mrf.mxu0
        %v460 = vadd.f32 0.0, %v459
        %v461 = vpop.f32.mrf.mxu0
        %v462 = vadd.f32 0.0, %v461
        %463 = vmatmul.bf16.gmra.mxu0 %v371
        %v464 = vpop.f32.mrf.mxu0
        %v465 = vadd.f32 0.0, %v464
        %v466 = vpop.f32.mrf.mxu0
        %v467 = vadd.f32 0.0, %v466
        %468 = vmatmul.bf16.gmra.mxu0 %v372
        %v469 = vpop.f32.mrf.mxu0
        %v470 = vadd.f32 0.0, %v469
        %v471 = vpop.f32.mrf.mxu0
        %v472 = vadd.f32 0.0, %v471
        %473 = vmatmul.bf16.gmra.mxu0 %v373
        %v474 = vpop.f32.mrf.mxu0
        %v475 = vadd.f32 0.0, %v474
        %v476 = vpop.f32.mrf.mxu0
        %v477 = vadd.f32 0.0, %v476
        %478 = vdwg.mxu0
        %v479 = vpack.c.bf16 %v440, %v440
        %v480 = vpack.c.bf16 %v442, %v442
        %v481 = vpack.c.bf16 %v445, %v445
        %v482 = vpack.c.bf16 %v447, %v447
        %v483 = vpack.c.bf16 %v450, %v450
        %v484 = vpack.c.bf16 %v452, %v452
        %v485 = vpack.c.bf16 %v455, %v455
        %v486 = vpack.c.bf16 %v457, %v457
        %v487 = vpack.c.bf16 %v460, %v460
        %v488 = vpack.c.bf16 %v462, %v462
        %v489 = vpack.c.bf16 %v465, %v465
        %v490 = vpack.c.bf16 %v467, %v467
        %v491 = vpack.c.bf16 %v470, %v470
        %v492 = vpack.c.bf16 %v472, %v472
        %v493 = vpack.c.bf16 %v475, %v475
        %v494 = vpack.c.bf16 %v477, %v477
        %s495 = smul.addr %s298, 4
        %s496 = scalar_lea.vmem [#allocation3], %s495
        %497 = vst [vmem:[%s496] sm:$0xf] %v479
        %498 = vst [vmem:[%s496 + $0x4] sm:$0xf] %v480
        %499 = vst [vmem:[%s496 + $0x8] sm:$0xf] %v481
        %500 = vst [vmem:[%s496 + $0xc] sm:$0xf] %v482
        %501 = vst [vmem:[%s496 + $0x10] sm:$0xf] %v483
        %502 = vst [vmem:[%s496 + $0x14] sm:$0xf] %v484
        %503 = vst [vmem:[%s496 + $0x18] sm:$0xf] %v485
        %504 = vst [vmem:[%s496 + $0x1c] sm:$0xf] %v486
        %505 = vst [vmem:[%s496 + $0x20] sm:$0xf] %v487
        %506 = vst [vmem:[%s496 + $0x24] sm:$0xf] %v488
        %507 = vst [vmem:[%s496 + $0x28] sm:$0xf] %v489
        %508 = vst [vmem:[%s496 + $0x2c] sm:$0xf] %v490
        %509 = vst [vmem:[%s496 + $0x30] sm:$0xf] %v491
        %510 = vst [vmem:[%s496 + $0x34] sm:$0xf] %v492
        %511 = vst [vmem:[%s496 + $0x38] sm:$0xf] %v493
        %512 = vst [vmem:[%s496 + $0x3c] sm:$0xf] %v494
      $region59: #{schema_gcn_forward.3} parent=31 // pred_fallthru
        _
      // Predicated region
      $region60: #{schema_gcn_forward.3} parent=31 // pred_check
        %p513 = pneg %p254
      $region61: #{schema_gcn_forward.3} parent=31 // pred_check_branch
        %515 = sbr.rel (%p513) target = $region63
      $region62: #{schema_gcn_forward.3} parent=31 // pred_region
        %516 = vst [vmem:[#allocation4] sm:$0xff] 0.0
        %517 = vst [vmem:[#allocation4 + $0x8] sm:$0xff] 0.0
        %518 = vst [vmem:[#allocation4 + $0x10] sm:$0xff] 0.0
        %519 = vst [vmem:[#allocation4 + $0x18] sm:$0xff] 0.0
        %520 = vst [vmem:[#allocation4 + $0x20] sm:$0xff] 0.0
        %521 = vst [vmem:[#allocation4 + $0x28] sm:$0xff] 0.0
        %522 = vst [vmem:[#allocation4 + $0x30] sm:$0xff] 0.0
        %523 = vst [vmem:[#allocation4 + $0x38] sm:$0xff] 0.0
        %524 = vst [vmem:[#allocation4 + $0x40] sm:$0xff] 0.0
        %525 = vst [vmem:[#allocation4 + $0x48] sm:$0xff] 0.0
        %526 = vst [vmem:[#allocation4 + $0x50] sm:$0xff] 0.0
        %527 = vst [vmem:[#allocation4 + $0x58] sm:$0xff] 0.0
        %528 = vst [vmem:[#allocation4 + $0x60] sm:$0xff] 0.0
        %529 = vst [vmem:[#allocation4 + $0x68] sm:$0xff] 0.0
        %530 = vst [vmem:[#allocation4 + $0x70] sm:$0xff] 0.0
        %531 = vst [vmem:[#allocation4 + $0x78] sm:$0xff] 0.0
      $region63: #{schema_gcn_forward.3} parent=31 // pred_fallthru
        _
      %v532 = vld [vmem:[#allocation4] sm:$0xff]
      %v533 = vld [vmem:[#allocation4 + $0x8] sm:$0xff]
      %v534 = vld [vmem:[#allocation4 + $0x10] sm:$0xff]
      %v535 = vld [vmem:[#allocation4 + $0x18] sm:$0xff]
      %v536 = vld [vmem:[#allocation4 + $0x20] sm:$0xff]
      %v537 = vld [vmem:[#allocation4 + $0x28] sm:$0xff]
      %v538 = vld [vmem:[#allocation4 + $0x30] sm:$0xff]
      %v539 = vld [vmem:[#allocation4 + $0x38] sm:$0xff]
      %v540 = vld [vmem:[#allocation4 + $0x40] sm:$0xff]
      %v541 = vld [vmem:[#allocation4 + $0x48] sm:$0xff]
      %v542 = vld [vmem:[#allocation4 + $0x50] sm:$0xff]
      %v543 = vld [vmem:[#allocation4 + $0x58] sm:$0xff]
      %v544 = vld [vmem:[#allocation4 + $0x60] sm:$0xff]
      %v545 = vld [vmem:[#allocation4 + $0x68] sm:$0xff]
      %v546 = vld [vmem:[#allocation4 + $0x70] sm:$0xff]
      %v547 = vld [vmem:[#allocation4 + $0x78] sm:$0xff]
      %v548 = vld [vmem:[%s229] sm:$0xf]
      %v549 = vld [vmem:[%s229 + $0x4] sm:$0xf]
      %v550 = vld [vmem:[%s229 + $0x8] sm:$0xf]
      %v551 = vld [vmem:[%s229 + $0xc] sm:$0xf]
      %v552 = vld [vmem:[%s229 + $0x10] sm:$0xf]
      %v553 = vld [vmem:[%s229 + $0x14] sm:$0xf]
      %v554 = vld [vmem:[%s229 + $0x18] sm:$0xf]
      %v555 = vld [vmem:[%s229 + $0x1c] sm:$0xf]
      %v556 = vld [vmem:[%s229 + $0x20] sm:$0xf]
      %v557 = vld [vmem:[%s229 + $0x24] sm:$0xf]
      %v558 = vld [vmem:[%s229 + $0x28] sm:$0xf]
      %v559 = vld [vmem:[%s229 + $0x2c] sm:$0xf]
      %v560 = vld [vmem:[%s229 + $0x30] sm:$0xf]
      %v561 = vld [vmem:[%s229 + $0x34] sm:$0xf]
      %v562 = vld [vmem:[%s229 + $0x38] sm:$0xf]
      %v563 = vld [vmem:[%s229 + $0x3c] sm:$0xf]
      %s564 = sshra.s32 %s249, 3
      %s565 = sand.u32 %s249, 7
      %s566 = smul.addr %s564, 4
      %s567 = scalar_lea.vmem [#allocation3], %s566
      %v568 = vld [vmem:[%s567] sm:$0xf]
      %v569 = vld [vmem:[%s567 + $0x4] sm:$0xf]
      %v570 = vld [vmem:[%s567 + $0x8] sm:$0xf]
      %v571 = vld [vmem:[%s567 + $0xc] sm:$0xf]
      %v572 = vld [vmem:[%s567 + $0x10] sm:$0xf]
      %v573 = vld [vmem:[%s567 + $0x14] sm:$0xf]
      %v574 = vld [vmem:[%s567 + $0x18] sm:$0xf]
      %v575 = vld [vmem:[%s567 + $0x1c] sm:$0xf]
      %v576 = vld [vmem:[%s567 + $0x20] sm:$0xf]
      %v577 = vld [vmem:[%s567 + $0x24] sm:$0xf]
      %v578 = vld [vmem:[%s567 + $0x28] sm:$0xf]
      %v579 = vld [vmem:[%s567 + $0x2c] sm:$0xf]
      %v580 = vld [vmem:[%s567 + $0x30] sm:$0xf]
      %v581 = vld [vmem:[%s567 + $0x34] sm:$0xf]
      %v582 = vld [vmem:[%s567 + $0x38] sm:$0xf]
      %v583 = vld [vmem:[%s567 + $0x3c] sm:$0xf]
      %v600 = vunpack.c.l.b16 %v548
      %v601 = vunpack.c.l.b16 %v549
      %v602 = vunpack.c.l.b16 %v550
      %v603 = vunpack.c.l.b16 %v551
      %v604 = vunpack.c.l.b16 %v552
      %v605 = vunpack.c.l.b16 %v553
      %v606 = vunpack.c.l.b16 %v554
      %v607 = vunpack.c.l.b16 %v555
      %v608 = vunpack.c.l.b16 %v556
      %v609 = vunpack.c.l.b16 %v557
      %v610 = vunpack.c.l.b16 %v558
      %v611 = vunpack.c.l.b16 %v559
      %v612 = vunpack.c.l.b16 %v560
      %v613 = vunpack.c.l.b16 %v561
      %v614 = vunpack.c.l.b16 %v562
      %v615 = vunpack.c.l.b16 %v563
      %v616 = vpack.c.b16 %v601, %v600
      %v617 = vpack.c.b16 %v603, %v602
      %v618 = vpack.c.b16 %v605, %v604
      %v619 = vpack.c.b16 %v607, %v606
      %v620 = vpack.c.b16 %v609, %v608
      %v621 = vpack.c.b16 %v611, %v610
      %v622 = vpack.c.b16 %v613, %v612
      %v623 = vpack.c.b16 %v615, %v614
      %v648 = vunpack.c.l.b16 %v568
      %v649 = vunpack.c.l.b16 %v569
      %v650 = vunpack.c.l.b16 %v570
      %v651 = vunpack.c.l.b16 %v571
      %v652 = vunpack.c.l.b16 %v572
      %v653 = vunpack.c.l.b16 %v573
      %v654 = vunpack.c.l.b16 %v574
      %v655 = vunpack.c.l.b16 %v575
      %v656 = vunpack.c.l.b16 %v576
      %v657 = vunpack.c.l.b16 %v577
      %v658 = vunpack.c.l.b16 %v578
      %v659 = vunpack.c.l.b16 %v579
      %v660 = vunpack.c.l.b16 %v580
      %v661 = vunpack.c.l.b16 %v581
      %v662 = vunpack.c.l.b16 %v582
      %v663 = vunpack.c.l.b16 %v583
      %v664 = vpack.c.b16 %v649, %v648
      %v665 = vpack.c.b16 %v651, %v650
      %v666 = vpack.c.b16 %v653, %v652
      %v667 = vpack.c.b16 %v655, %v654
      %v668 = vpack.c.b16 %v657, %v656
      %v669 = vpack.c.b16 %v659, %v658
      %v670 = vpack.c.b16 %v661, %v660
      %v671 = vpack.c.b16 %v663, %v662
      %680 = vmatpush.bf16.msra.mxu0 %v671
      %681 = vmatpush.bf16.msra.mxu0 %v670
      %682 = vmatpush.bf16.msra.mxu0 %v669
      %683 = vmatpush.bf16.msra.mxu0 %v668
      %684 = vmatpush.bf16.msra.mxu0 %v667
      %685 = vmatpush.bf16.msra.mxu0 %v666
      %686 = vmatpush.bf16.msra.mxu0 %v665
      %687 = vmatpush.bf16.msra.mxu0 %v664
      %688 = vmatmul.bf16.gmra.mxu0 %v616
      %v689 = vpop.f32.mrf.mxu0
      %v690 = vadd.f32 0.0, %v689
      %v691 = vpop.f32.mrf.mxu0
      %v692 = vadd.f32 0.0, %v691
      %693 = vmatmul.bf16.gmra.mxu0 %v617
      %v694 = vpop.f32.mrf.mxu0
      %v695 = vadd.f32 0.0, %v694
      %v696 = vpop.f32.mrf.mxu0
      %v697 = vadd.f32 0.0, %v696
      %698 = vmatmul.bf16.gmra.mxu0 %v618
      %v699 = vpop.f32.mrf.mxu0
      %v700 = vadd.f32 0.0, %v699
      %v701 = vpop.f32.mrf.mxu0
      %v702 = vadd.f32 0.0, %v701
      %703 = vmatmul.bf16.gmra.mxu0 %v619
      %v704 = vpop.f32.mrf.mxu0
      %v705 = vadd.f32 0.0, %v704
      %v706 = vpop.f32.mrf.mxu0
      %v707 = vadd.f32 0.0, %v706
      %708 = vmatmul.bf16.gmra.mxu0 %v620
      %v709 = vpop.f32.mrf.mxu0
      %v710 = vadd.f32 0.0, %v709
      %v711 = vpop.f32.mrf.mxu0
      %v712 = vadd.f32 0.0, %v711
      %713 = vmatmul.bf16.gmra.mxu0 %v621
      %v714 = vpop.f32.mrf.mxu0
      %v715 = vadd.f32 0.0, %v714
      %v716 = vpop.f32.mrf.mxu0
      %v717 = vadd.f32 0.0, %v716
      %718 = vmatmul.bf16.gmra.mxu0 %v622
      %v719 = vpop.f32.mrf.mxu0
      %v720 = vadd.f32 0.0, %v719
      %v721 = vpop.f32.mrf.mxu0
      %v722 = vadd.f32 0.0, %v721
      %723 = vmatmul.bf16.gmra.mxu0 %v623
      %v724 = vpop.f32.mrf.mxu0
      %v725 = vadd.f32 0.0, %v724
      %v726 = vpop.f32.mrf.mxu0
      %v727 = vadd.f32 0.0, %v726
      %728 = vdwg.mxu0
      %v729 = vadd.f32 %v532, %v690
      %v730 = vadd.f32 %v533, %v692
      %v731 = vadd.f32 %v534, %v695
      %v732 = vadd.f32 %v535, %v697
      %v733 = vadd.f32 %v536, %v700
      %v734 = vadd.f32 %v537, %v702
      %v735 = vadd.f32 %v538, %v705
      %v736 = vadd.f32 %v539, %v707
      %v737 = vadd.f32 %v540, %v710
      %v738 = vadd.f32 %v541, %v712
      %v739 = vadd.f32 %v542, %v715
      %v740 = vadd.f32 %v543, %v717
      %v741 = vadd.f32 %v544, %v720
      %v742 = vadd.f32 %v545, %v722
      %v743 = vadd.f32 %v546, %v725
      %v744 = vadd.f32 %v547, %v727
      %745 = vst [vmem:[#allocation4] sm:$0xff] %v729
      %746 = vst [vmem:[#allocation4 + $0x8] sm:$0xff] %v730
      %747 = vst [vmem:[#allocation4 + $0x10] sm:$0xff] %v731
      %748 = vst [vmem:[#allocation4 + $0x18] sm:$0xff] %v732
      %749 = vst [vmem:[#allocation4 + $0x20] sm:$0xff] %v733
      %750 = vst [vmem:[#allocation4 + $0x28] sm:$0xff] %v734
      %751 = vst [vmem:[#allocation4 + $0x30] sm:$0xff] %v735
      %752 = vst [vmem:[#allocation4 + $0x38] sm:$0xff] %v736
      %753 = vst [vmem:[#allocation4 + $0x40] sm:$0xff] %v737
      %754 = vst [vmem:[#allocation4 + $0x48] sm:$0xff] %v738
      %755 = vst [vmem:[#allocation4 + $0x50] sm:$0xff] %v739
      %756 = vst [vmem:[#allocation4 + $0x58] sm:$0xff] %v740
      %757 = vst [vmem:[#allocation4 + $0x60] sm:$0xff] %v741
      %758 = vst [vmem:[#allocation4 + $0x68] sm:$0xff] %v742
      %759 = vst [vmem:[#allocation4 + $0x70] sm:$0xff] %v743
      %760 = vst [vmem:[#allocation4 + $0x78] sm:$0xff] %v744
      // Predicated region
      $region64: #{schema_gcn_forward.3} parent=31 // pred_check
        %p761 = pneg %p254
      $region65: #{schema_gcn_forward.3} parent=31 // pred_check_branch
        %763 = sbr.rel (%p761) target = $region67
      $region66: #{schema_gcn_forward.3} parent=31 // pred_region
        %v764 = vld [vmem:[#allocation4] sm:$0xff]
        %v765 = vld [vmem:[#allocation4 + $0x8] sm:$0xff]
        %v766 = vld [vmem:[#allocation4 + $0x10] sm:$0xff]
        %v767 = vld [vmem:[#allocation4 + $0x18] sm:$0xff]
        %v768 = vld [vmem:[#allocation4 + $0x20] sm:$0xff]
        %v769 = vld [vmem:[#allocation4 + $0x28] sm:$0xff]
        %v770 = vld [vmem:[#allocation4 + $0x30] sm:$0xff]
        %v771 = vld [vmem:[#allocation4 + $0x38] sm:$0xff]
        %v772 = vld [vmem:[#allocation4 + $0x40] sm:$0xff]
        %v773 = vld [vmem:[#allocation4 + $0x48] sm:$0xff]
        %v774 = vld [vmem:[#allocation4 + $0x50] sm:$0xff]
        %v775 = vld [vmem:[#allocation4 + $0x58] sm:$0xff]
        %v776 = vld [vmem:[#allocation4 + $0x60] sm:$0xff]
        %v777 = vld [vmem:[#allocation4 + $0x68] sm:$0xff]
        %v778 = vld [vmem:[#allocation4 + $0x70] sm:$0xff]
        %v779 = vld [vmem:[#allocation4 + $0x78] sm:$0xff]
        %v780 = vld [vmem:[%s238] sm:$0x1]
        %v782 = vperm.slane %v780, 0
        %v784 = vadd.f32 %v764, %v782
        %v785 = vadd.f32 %v765, %v782
        %v786 = vadd.f32 %v766, %v782
        %v787 = vadd.f32 %v767, %v782
        %v788 = vadd.f32 %v768, %v782
        %v789 = vadd.f32 %v769, %v782
        %v790 = vadd.f32 %v770, %v782
        %v791 = vadd.f32 %v771, %v782
        %v792 = vadd.f32 %v772, %v782
        %v793 = vadd.f32 %v773, %v782
        %v794 = vadd.f32 %v774, %v782
        %v795 = vadd.f32 %v775, %v782
        %v796 = vadd.f32 %v776, %v782
        %v797 = vadd.f32 %v777, %v782
        %v798 = vadd.f32 %v778, %v782
        %v799 = vadd.f32 %v779, %v782
        %v800 = vmax.f32 %v784, 0.0
        %v801 = vmax.f32 %v785, 0.0
        %v802 = vmax.f32 %v786, 0.0
        %v803 = vmax.f32 %v787, 0.0
        %v804 = vmax.f32 %v788, 0.0
        %v805 = vmax.f32 %v789, 0.0
        %v806 = vmax.f32 %v790, 0.0
        %v807 = vmax.f32 %v791, 0.0
        %v808 = vmax.f32 %v792, 0.0
        %v809 = vmax.f32 %v793, 0.0
        %v810 = vmax.f32 %v794, 0.0
        %v811 = vmax.f32 %v795, 0.0
        %v812 = vmax.f32 %v796, 0.0
        %v813 = vmax.f32 %v797, 0.0
        %v814 = vmax.f32 %v798, 0.0
        %v815 = vmax.f32 %v799, 0.0
        %s816 = smul.u32 %s21, 128
        %p817 = scmp.lt.s32.totalorder %s20, 1
        // Predicated region
        $region68: #{schema_gcn_forward.3} parent=66 // pred_check
          %p818 = pneg %p817
        $region69: #{schema_gcn_forward.3} parent=66 // pred_check_branch
          %820 = sbr.rel (%p818) target = $region71
        $region70: #{schema_gcn_forward.3} parent=66 // pred_region
          %v821 = vpack.c.bf16 %v800, %v800
          %v822 = vpack.c.bf16 %v801, %v801
          %v823 = vpack.c.bf16 %v802, %v802
          %v824 = vpack.c.bf16 %v803, %v803
          %v825 = vpack.c.bf16 %v804, %v804
          %v826 = vpack.c.bf16 %v805, %v805
          %v827 = vpack.c.bf16 %v806, %v806
          %v828 = vpack.c.bf16 %v807, %v807
          %v829 = vpack.c.bf16 %v808, %v808
          %v830 = vpack.c.bf16 %v809, %v809
          %v831 = vpack.c.bf16 %v810, %v810
          %v832 = vpack.c.bf16 %v811, %v811
          %v833 = vpack.c.bf16 %v812, %v812
          %v834 = vpack.c.bf16 %v813, %v813
          %v835 = vpack.c.bf16 %v814, %v814
          %v836 = vpack.c.bf16 %v815, %v815
          %s837 = sshra.s32 %s816, 3
          %s838 = sand.u32 %s816, 7
          %s839 = smul.addr %s837, 4
          %s840 = scalar_lea.vmem [#allocation2], %s839
          %841 = vst [vmem:[%s840] sm:$0xf] %v821
          %842 = vst [vmem:[%s840 + $0x4] sm:$0xf] %v822
          %843 = vst [vmem:[%s840 + $0x8] sm:$0xf] %v823
          %844 = vst [vmem:[%s840 + $0xc] sm:$0xf] %v824
          %845 = vst [vmem:[%s840 + $0x10] sm:$0xf] %v825
          %846 = vst [vmem:[%s840 + $0x14] sm:$0xf] %v826
          %847 = vst [vmem:[%s840 + $0x18] sm:$0xf] %v827
          %848 = vst [vmem:[%s840 + $0x1c] sm:$0xf] %v828
          %849 = vst [vmem:[%s840 + $0x20] sm:$0xf] %v829
          %850 = vst [vmem:[%s840 + $0x24] sm:$0xf] %v830
          %851 = vst [vmem:[%s840 + $0x28] sm:$0xf] %v831
          %852 = vst [vmem:[%s840 + $0x2c] sm:$0xf] %v832
          %853 = vst [vmem:[%s840 + $0x30] sm:$0xf] %v833
          %854 = vst [vmem:[%s840 + $0x34] sm:$0xf] %v834
          %855 = vst [vmem:[%s840 + $0x38] sm:$0xf] %v835
          %856 = vst [vmem:[%s840 + $0x3c] sm:$0xf] %v836
        $region71: #{schema_gcn_forward.3} parent=66 // pred_fallthru
          _
        %p857 = scmp.eq.s32.totalorder %s20, 1
        // Predicated region
        $region72: #{schema_gcn_forward.3} parent=66 // pred_check
          %p858 = pneg %p857
        $region73: #{schema_gcn_forward.3} parent=66 // pred_check_branch
          %860 = sbr.rel (%p858) target = $region75
        $region74: #{schema_gcn_forward.3} parent=66 // pred_region
          %861 = vst [vmem:[%s245] sm:$0xff] %v800
          %862 = vst [vmem:[%s245 + $0x8] sm:$0xff] %v801
          %863 = vst [vmem:[%s245 + $0x10] sm:$0xff] %v802
          %864 = vst [vmem:[%s245 + $0x18] sm:$0xff] %v803
          %865 = vst [vmem:[%s245 + $0x20] sm:$0xff] %v804
          %866 = vst [vmem:[%s245 + $0x28] sm:$0xff] %v805
          %867 = vst [vmem:[%s245 + $0x30] sm:$0xff] %v806
          %868 = vst [vmem:[%s245 + $0x38] sm:$0xff] %v807
          %869 = vst [vmem:[%s245 + $0x40] sm:$0xff] %v808
          %870 = vst [vmem:[%s245 + $0x48] sm:$0xff] %v809
          %871 = vst [vmem:[%s245 + $0x50] sm:$0xff] %v810
          %872 = vst [vmem:[%s245 + $0x58] sm:$0xff] %v811
          %873 = vst [vmem:[%s245 + $0x60] sm:$0xff] %v812
          %874 = vst [vmem:[%s245 + $0x68] sm:$0xff] %v813
          %875 = vst [vmem:[%s245 + $0x70] sm:$0xff] %v814
          %876 = vst [vmem:[%s245 + $0x78] sm:$0xff] %v815
        $region75: #{schema_gcn_forward.3} parent=66 // pred_fallthru
          _
      $region67: #{schema_gcn_forward.3} parent=31 // pred_fallthru
        _
      %p877 = scmp.eq.s32.totalorder %s20, 1
      %s878 = scalar_select %p877, %s21, 0
      %s879 = smul.u32 16, %s878
      %p880 = scmp.lt.s32.totalorder %s879, 15
      %s881 = scalar_select %p880, %s879, 15
      %s882 = smul.addr %s881, 8
      %s883 = scalar_lea.vmem %s4, %s882
      // Predicated region
      $region76: #{schema_gcn_forward.3} parent=31 // pred_check
        %p884 = pneg %p136
      $region77: #{schema_gcn_forward.3} parent=31 // pred_check_branch
        %886 = sbr.rel (%p884) target = $region79
      $region78: #{schema_gcn_forward.3} parent=31 // pred_region
        %p887 = scmp.eq.s32.totalorder %s20, 1
        %s888 = scalar_select %p887, %s21, 0
        %s889 = smul.u32 16, %s888
      $region79: #{schema_gcn_forward.3} parent=31 // pred_fallthru
        _
    $region32: #{schema_gcn_forward.3} parent=5 // pred_fallthru
      _
    %p890 = scmp.le.s32.totalorder 2, %s10
    // Predicated region
    $region80: #{schema_gcn_forward.3} parent=5 // pred_check
      %p891 = pneg %p890
    $region81: #{schema_gcn_forward.3} parent=5 // pred_check_branch
      %893 = sbr.rel (%p891) target = $region83
    $region82: #{schema_gcn_forward.3} parent=5 // pred_region
      %s894 = ssub.s32 %s10, 2
      // Predicated region
      $region84: #{schema_gcn_forward.3} parent=82 // pred_check
        %p895 = pneg %p142
      $region85: #{schema_gcn_forward.3} parent=82 // pred_check_branch
        %897 = sbr.rel (%p895) target = $region87
      $region86: #{schema_gcn_forward.3} parent=82 // pred_region
        %p898 = scmp.eq.s32.totalorder %s23, 1
        %s899 = scalar_select %p898, %s24, 0
        %s900 = smul.u32 16, %s899
        %p901 = scmp.lt.s32.totalorder %s900, 15
        %s902 = scalar_select %p901, %s900, 15
        %s903 = smul.addr %s902, 8
        %s904 = scalar_lea.vmem %s4, %s903
      $region87: #{schema_gcn_forward.3} parent=82 // pred_fallthru
        _
    $region83: #{schema_gcn_forward.3} parent=5 // pred_fallthru
      _
  $region6: #{schema_gcn_forward.3} parent=0 // loop_footer
    %s14 = sadd.s32 1, %s10
  $region7: #{schema_gcn_forward.3} parent=0 // loop_footer_branch
    %9 = sbr.rel target = $region3
  $region8: #{schema_gcn_forward.3} parent=0 // loop_exit
    _
  %905 = vsyncmov [#allocation5]
  %s906 = vpop.sfrf %905
  %p907 = scmp.eq.s32.totalorder %s906, 0
  %p908 = pneg %p907
  %910 = shalt.err (%p908)

</llo_original>
